<compile_context>
chip_gen: v7x
topology: tpu7x:2x2x1
jax: 0.10.0
libtpu: 0.0.40
codegen_flags: <defaults>
</compile_context>

<pallas_src>
import numpy as np
import jax
import jax.numpy as jnp
from jax import lax
from jax.experimental import pallas as pl
from jax.experimental.pallas import tpu as pltpu

HIDDEN = 128      # hidden_size (small synthetic value)
ATOM_FDIM = 32    # synthetic atom feature dim
BOND_FDIM = 48    # synthetic combined atom+bond feature dim (atom_messages=False)
FDIM_PAD = 128    # feature dims zero-padded to full MXU/lane width
DEPTH = 4
NEG_INF = -1e9


# ----------------------------------------------------------------------------
# Fused Pallas kernel: message passing + sumstyle/attention readout
# ----------------------------------------------------------------------------
def mpn_kernel(bond_f_ref, a2b_ref, b2a_ref, atom_f_ref,
               molid_col_ref, molid_row_ref, pool_ref,
               wi_ref, bi_ref, whc_ref, bhc_ref,
               wah_ref, bah_ref, wo_ref, bo_ref,
               wa_ref, ba_ref, wb_ref, bb_ref,
               out_ref):
    """Shapes (NB = padded bonds, NA = padded atoms, NM = molecules, H = hidden):

    bond_f : (NB, 128)   zero-padded bond features, rows laid out [fwd half | rev half]
    a2b    : (NA, NB)    bf16 incoming-bond multiplicity matrix (incl. pad-bond dups)
    b2a    : (NB, NA)    bf16 one-hot of bond-origin atom
    atom_f : (NA, 128)   zero-padded atom features
    molid_*: (NA,1)/(1,NA) f32 molecule id per atom (-1 for padding atoms)
    pool   : (NM, NA)    row i = 1/a_size_i over molecule i's atoms (mean pooling)
    out    : (NM, H)     mol_vecs
    """
    f32 = jnp.float32
    a2b = a2b_ref[...].astype(f32)
    b2a = b2a_ref[...].astype(f32)

    # ---------------- directed-bond message passing -------------------------
    inp = jnp.dot(bond_f_ref[...], wi_ref[...], preferred_element_type=f32) + bi_ref[...]
    message = jnp.maximum(inp, 0.0)                     # relu(W_i(bond_features))
    nb = message.shape[0]
    half = nb // 2                                      # rev(b) = (b + half) % nb

    for _ in range(DEPTH - 1):
        # nei_a_message.sum(1): per-atom sum of incoming bond messages
        a_msg = jnp.dot(a2b, message, preferred_element_type=f32)        # (NA, H)
        # message[b2revb]: bonds are laid out as [fwd | rev], so the reverse bond is an
        # aligned half-rotation (two 8-aligned sublane slices + concat, no MXU matmul).
        rev_message = jnp.roll(message, half, axis=0)
        # a_message[b2a] - rev_message.
        # TODO(synk): replace the b2a one-hot matmul with a sublane row-gather of a_msg
        # (remaining O(NB*NA*H) structural FLOPs) once dynamic row-gather is used here.
        msg = jnp.dot(b2a, a_msg, preferred_element_type=f32) - rev_message
        # W_h Sequential (no activation between layers) pre-composed into ONE matmul.
        msg = jnp.dot(msg, whc_ref[...], preferred_element_type=f32) + bhc_ref[...]
        message = jnp.maximum(inp + msg, 0.0)           # relu(input + message)

    a_message = jnp.dot(a2b, message, preferred_element_type=f32)        # (NA, H)

    # ---------------- sumstyle + attention readout ---------------------------
    a_input = (jnp.dot(atom_f_ref[...], wah_ref[...], preferred_element_type=f32)
               + bah_ref[...] + a_message)              # W_ah(atom_features) + a_message
    atom_h = jnp.maximum(
        jnp.dot(a_input, wo_ref[...], preferred_element_type=f32) + bo_ref[...], 0.0)

    # attention: softmax(W_a(cur) @ cur.T) restricted to each molecule via an
    # in-kernel block-diagonal mask built from per-atom molecule ids (no NAxNA input).
    q = jnp.dot(atom_h, wa_ref[...], preferred_element_type=f32) + ba_ref[...]
    s = lax.dot_general(q, atom_h, (((1,), (1,)), ((), ())),
                        preferred_element_type=f32)
    col = molid_col_ref[...]
    row = molid_row_ref[...]
    same_mol = jnp.logical_and(col == row, col >= 0.0)
    s = jnp.where(same_mol, s, NEG_INF)
    s = s - jnp.max(s, axis=-1, keepdims=True)
    p = jnp.exp(s)
    p = p * pl.reciprocal(jnp.sum(p, axis=-1, keepdims=True), approx=True)
    att = jnp.dot(p, atom_h, preferred_element_type=f32)
    att_h = jnp.maximum(
        jnp.dot(att, wb_ref[...], preferred_element_type=f32) + bb_ref[...], 0.0)

    # mol_vec = (cur_hiddens + att_hiddens).sum(0) / a_size, per molecule (mean pooling)
    out_ref[...] = jnp.dot(pool_ref[...], atom_h + att_h, preferred_element_type=f32)


# ----------------------------------------------------------------------------
# Wrapper
# ----------------------------------------------------------------------------
def mpn_encoder_pallas(inputs, params):
    # TODO(synk): for realistic batch sizes add a grid over bond/atom row tiles
    # (dimension_semantics=("parallel",...)) and a per-molecule / flash-style tiled
    # attention softmax; at these small shapes a single fused program is optimal.
    n_mols = inputs["pool"].shape[0]
    vmem = pl.BlockSpec(memory_space=pltpu.MemorySpace.VMEM)
    args = (inputs["bond_f"], inputs["A2B"], inputs["B2A"], inputs["atom_f"],
            inputs["mol_id_col"], inputs["mol_id_row"], inputs["pool"],
            params["W_i_T"], params["b_i"], params["W_hc_T"], params["b_hc"],
            params["W_ah_T"], params["b_ah"], params["W_o_T"], params["b_o"],
            params["W_a_T"], params["b_a"], params["W_b_T"], params["b_b"])
    return pl.pallas_call(
        mpn_kernel,
        out_shape=jax.ShapeDtypeStruct((n_mols, HIDDEN), jnp.float32),
        in_specs=[vmem] * len(args),
        out_specs=vmem,
        compiler_params=pltpu.CompilerParams(vmem_limit_bytes=64 * 1024 * 1024),
    )(*args)


# ----------------------------------------------------------------------------
# Synthetic BatchMolGraph structure (chain molecules), same indexing scheme as
# the PyTorch BatchMolGraph (padding atom 0 / padding bond 0).
# ----------------------------------------------------------------------------
def build_chain_batch(mol_sizes):
    n_atoms, n_bonds = 1, 1
    a2b, b2a, b2revb, a_scope = [[]], [0], [0], []
    for sz in mol_sizes:
        mg_a2b = [[] for _ in range(sz)]
        mg_b2a, mg_b2revb = [], []
        nb = 0
        for a1 in range(sz - 1):
            a2 = a1 + 1
            b1, b2 = nb, nb + 1
            mg_a2b[a2].append(b1); mg_b2a.append(a1)
            mg_a2b[a1].append(b2); mg_b2a.append(a2)
            mg_b2revb += [b2, b1]
            nb += 2
        for a in range(sz):
            a2b.append([b + n_bonds for b in mg_a2b[a]])
        for b in range(nb):
            b2a.append(n_atoms + mg_b2a[b])
            b2revb.append(n_bonds + mg_b2revb[b])
        a_scope.append((n_atoms, sz))
        n_atoms += sz
        n_bonds += nb
    max_nb = max(len(x) for x in a2b)
    a2b_arr = np.array([a2b[a] + [0] * (max_nb - len(a2b[a])) for a in range(n_atoms)],
                       dtype=np.int32)
    return (n_atoms, n_bonds, a2b_arr,
            np.array(b2a, np.int32), np.array(b2revb, np.int32), a_scope)


def _round_up(x, m):
    return ((x + m - 1) // m) * m


def build_kernel_inputs(n_atoms, n_bonds, a2b_arr, b2a, a_scope, atom_f, bond_f):
    """Re-lay bonds as [forward half | reverse half] so b2revb == roll by NB/2, build the
    bf16 structural matrices, per-atom mol ids, mean-pooling matrix and lane-padded
    feature matrices consumed by the kernel."""
    npairs = (n_bonds - 1) // 2
    half = _round_up(npairs + 1, 8)      # +1 for the padding bond's forward slot
    nbk = 2 * half
    na_pad = _round_up(n_atoms, 8)

    def kidx(b):                         # PyTorch bond index -> kernel bond row
        if b == 0:
            return 0                     # padding bond (its mirror lives at `half`)
        p = (b - 1) // 2
        return (1 + p) if (b % 2 == 1) else (half + 1 + p)

    A2B = np.zeros((na_pad, nbk), np.float32)
    for a in range(n_atoms):
        for b in a2b_arr[a]:             # includes padding zeros (gathers the pad bond)
            A2B[a, kidx(int(b))] += 1.0
    B2A = np.zeros((nbk, na_pad), np.float32)
    B2A[:, 0] = 1.0                      # pad / unused bond rows originate at pad atom 0
    for b in range(1, n_bonds):
        k = kidx(b)
        B2A[k, :] = 0.0
        B2A[k, b2a[b]] = 1.0

    n_mols = len(a_scope)
    mol_id = -np.ones((na_pad,), np.float32)
    pool = np.zeros((n_mols, na_pad), np.float32)
    for i, (a_start, a_size) in enumerate(a_scope):
        mol_id[a_start:a_start + a_size] = float(i)
        pool[i, a_start:a_start + a_size] = 1.0 / a_size

    bond_f_np = np.asarray(bond_f)
    bond_f_k = np.zeros((nbk, FDIM_PAD), np.float32)
    for b in range(n_bonds):
        bond_f_k[kidx(b), :BOND_FDIM] = bond_f_np[b]
    atom_f_k = np.zeros((na_pad, FDIM_PAD), np.float32)
    atom_f_k[:n_atoms, :ATOM_FDIM] = np.asarray(atom_f)

    return {
        "bond_f": jnp.asarray(bond_f_k),
        "atom_f": jnp.asarray(atom_f_k),
        "A2B": jnp.asarray(A2B, jnp.bfloat16),   # 0/1/count values are exact in bf16
        "B2A": jnp.asarray(B2A, jnp.bfloat16),
        "mol_id_col": jnp.asarray(mol_id.reshape(na_pad, 1)),
        "mol_id_row": jnp.asarray(mol_id.reshape(1, na_pad)),
        "pool": jnp.asarray(pool),               # keep f32: 1/a_size is not bf16-exact
    }


def build_kernel_params(p):
    W_i_T = jnp.zeros((FDIM_PAD, HIDDEN), jnp.float32).at[:BOND_FDIM].set(p["W_i"].T)
    W_ah_T = jnp.zeros((FDIM_PAD, HIDDEN), jnp.float32).at[:ATOM_FDIM].set(p["W_ah"].T)
    # compose the activation-free W_h Sequential into a single (H,H) weight + bias
    W_hc = p["W_h"][0].T
    b_hc = p["b_h"][0]
    for l in range(1, DEPTH):
        W_hc = W_hc @ p["W_h"][l].T
        b_hc = b_hc @ p["W_h"][l].T + p["b_h"][l]
    return {
        "W_i_T": W_i_T, "b_i": p["b_i"].reshape(1, HIDDEN),
        "W_hc_T": W_hc, "b_hc": b_hc.reshape(1, HIDDEN),
        "W_ah_T": W_ah_T, "b_ah": p["b_ah"].reshape(1, HIDDEN),
        "W_o_T": p["W_o"].T, "b_o": p["b_o"].reshape(1, HIDDEN),
        "W_a_T": p["W_a"].T, "b_a": p["b_a"].reshape(1, HIDDEN),
        "W_b_T": p["W_b"].T, "b_b": p["b_b"].reshape(1, HIDDEN),
    }


# ----------------------------------------------------------------------------
# Pure-JAX reference (mirrors the PyTorch forward, with the ragged gathers)
# ----------------------------------------------------------------------------
def reference_forward(atom_f, bond_f, a2b, b2a, b2revb, a_scope, p):
    inp = bond_f @ p["W_i"].T + p["b_i"]
    message = jax.nn.relu(inp)
    for _ in range(DEPTH - 1):
        a_msg = message[a2b].sum(axis=1)
        message = a_msg[b2a] - message[b2revb]
        for l in range(DEPTH):
            message = message @ p["W_h"][l].T + p["b_h"][l]
        message = jax.nn.relu(inp + message)
    a_msg = message[a2b].sum(axis=1)
    a_input = atom_f @ p["W_ah"].T + p["b_ah"] + a_msg
    atom_h = jax.nn.relu(a_input @ p["W_o"].T + p["b_o"])
    mol_vecs = []
    for (a_start, a_size) in a_scope:
        cur = atom_h[a_start:a_start + a_size]
        att_w = jax.nn.softmax((cur @ p["W_a"].T + p["b_a"]) @ cur.T, axis=1)
        att_h = jax.nn.relu((att_w @ cur) @ p["W_b"].T + p["b_b"])
        mol_vecs.append((cur + att_h).sum(axis=0) / a_size)
    return jnp.stack(mol_vecs, axis=0)


# ----------------------------------------------------------------------------
if __name__ == "__main__":
    # graph: 2 chain molecules with 3 and 4 atoms (+ padding atom/bond 0)
    mol_sizes = [3, 4]
    n_atoms, n_bonds, a2b_arr, b2a, b2revb, a_scope = build_chain_batch(mol_sizes)

    key = jax.random.PRNGKey(0)
    ks = jax.random.split(key, 16)

    def init(k, shape, scale=0.05):
        return (scale * jax.random.normal(k, shape)).astype(jnp.float32)

    ref_params = {
        "W_i": init(ks[0], (HIDDEN, BOND_FDIM)), "b_i": init(ks[1], (HIDDEN,)),
        "W_h": init(ks[2], (DEPTH, HIDDEN, HIDDEN)), "b_h": init(ks[3], (DEPTH, HIDDEN)),
        "W_ah": init(ks[4], (HIDDEN, ATOM_FDIM)), "b_ah": init(ks[5], (HIDDEN,)),
        "W_o": init(ks[6], (HIDDEN, HIDDEN)), "b_o": init(ks[7], (HIDDEN,)),
        "W_a": init(ks[8], (HIDDEN, HIDDEN)), "b_a": init(ks[9], (HIDDEN,)),
        "W_b": init(ks[10], (HIDDEN, HIDDEN)), "b_b": init(ks[11], (HIDDEN,)),
    }

    # synthetic features; row 0 is the zero padding atom/bond (as in BatchMolGraph)
    atom_f = jax.random.normal(ks[12], (n_atoms, ATOM_FDIM), jnp.float32).at[0].set(0.0)
    bond_f = jax.random.normal(ks[13], (n_bonds, BOND_FDIM), jnp.float32).at[0].set(0.0)

    inputs = build_kernel_inputs(n_atoms, n_bonds, a2b_arr, b2a, a_scope, atom_f, bond_f)
    params = build_kernel_params(ref_params)

    out = jax.block_until_ready(mpn_encoder_pallas(inputs, params))

    ref = reference_forward(atom_f, bond_f,
                            jnp.asarray(a2b_arr), jnp.asarray(b2a), jnp.asarray(b2revb),
                            a_scope, ref_params)

    assert out.shape == (len(mol_sizes), HIDDEN)
    assert np.allclose(np.asarray(out), np.asarray(ref), atol=2e-3, rtol=2e-3), \
        "Pallas output does not match pure-JAX reference"
    print("KERNEL_OK")
</pallas_src>

<mosaic_0001>
module attributes {stable_mosaic.version = 11 : i64} {
  func.func @mpn_kernel(%arg0: memref<16x128xf32, #tpu.memory_space<vmem>>, %arg1: memref<8x16xbf16, #tpu.memory_space<vmem>>, %arg2: memref<16x8xbf16, #tpu.memory_space<vmem>>, %arg3: memref<8x128xf32, #tpu.memory_space<vmem>>, %arg4: memref<8x1xf32, #tpu.memory_space<vmem>>, %arg5: memref<1x8xf32, #tpu.memory_space<vmem>>, %arg6: memref<2x8xf32, #tpu.memory_space<vmem>>, %arg7: memref<128x128xf32, #tpu.memory_space<vmem>>, %arg8: memref<1x128xf32, #tpu.memory_space<vmem>>, %arg9: memref<128x128xf32, #tpu.memory_space<vmem>>, %arg10: memref<1x128xf32, #tpu.memory_space<vmem>>, %arg11: memref<128x128xf32, #tpu.memory_space<vmem>>, %arg12: memref<1x128xf32, #tpu.memory_space<vmem>>, %arg13: memref<128x128xf32, #tpu.memory_space<vmem>>, %arg14: memref<1x128xf32, #tpu.memory_space<vmem>>, %arg15: memref<128x128xf32, #tpu.memory_space<vmem>>, %arg16: memref<1x128xf32, #tpu.memory_space<vmem>>, %arg17: memref<128x128xf32, #tpu.memory_space<vmem>>, %arg18: memref<1x128xf32, #tpu.memory_space<vmem>>, %arg19: memref<2x128xf32, #tpu.memory_space<vmem>>) attributes {dimension_semantics = [], scalar_prefetch = 0 : i64, scratch_operands = 0 : i64, tpu.core_type = #tpu.core_type<tc>} {
    %c0 = arith.constant 0 : index
    %c0_0 = arith.constant 0 : index
    %0 = vector.load %arg1[%c0, %c0_0] : memref<8x16xbf16, #tpu.memory_space<vmem>>, vector<8x16xbf16>
    %1 = arith.extf %0 : vector<8x16xbf16> to vector<8x16xf32>
    %c0_1 = arith.constant 0 : index
    %c0_2 = arith.constant 0 : index
    %2 = vector.load %arg2[%c0_1, %c0_2] : memref<16x8xbf16, #tpu.memory_space<vmem>>, vector<16x8xbf16>
    %3 = arith.extf %2 : vector<16x8xbf16> to vector<16x8xf32>
    %c0_3 = arith.constant 0 : index
    %c0_4 = arith.constant 0 : index
    %4 = vector.load %arg0[%c0_3, %c0_4] : memref<16x128xf32, #tpu.memory_space<vmem>>, vector<16x128xf32>
    %c0_5 = arith.constant 0 : index
    %c0_6 = arith.constant 0 : index
    %5 = vector.load %arg7[%c0_5, %c0_6] : memref<128x128xf32, #tpu.memory_space<vmem>>, vector<128x128xf32>
    %cst = arith.constant dense<0.000000e+00> : vector<16x128xf32>
    %6 = tpu.matmul %4, %5, %cst {dimension_numbers = #tpu.dot_dimension_numbers<[1], [0], [0], [1], [0, 0, 1, 1], [], []>} : vector<16x128xf32>, vector<128x128xf32>, vector<16x128xf32> -> vector<16x128xf32>
    %c0_7 = arith.constant 0 : index
    %c0_8 = arith.constant 0 : index
    %7 = vector.load %arg8[%c0_7, %c0_8] : memref<1x128xf32, #tpu.memory_space<vmem>>, vector<1x128xf32>
    %8 = vector.broadcast %7 : vector<1x128xf32> to vector<16x128xf32>
    %9 = arith.addf %6, %8 : vector<16x128xf32>
    %cst_9 = arith.constant 0.000000e+00 : f32
    %10 = vector.broadcast %cst_9 : f32 to vector<16x128xf32>
    %11 = arith.maximumf %9, %10 : vector<16x128xf32>
    %cst_10 = arith.constant dense<0.000000e+00> : vector<8x128xf32>
    %12 = tpu.matmul %1, %11, %cst_10 {dimension_numbers = #tpu.dot_dimension_numbers<[1], [0], [0], [1], [0, 0, 1, 1], [], []>} : vector<8x16xf32>, vector<16x128xf32>, vector<8x128xf32> -> vector<8x128xf32>
    %13 = vector.extract_strided_slice %11 {offsets = [8, 0], sizes = [8, 128], strides = [1, 1]} : vector<16x128xf32> to vector<8x128xf32>
    %14 = vector.extract_strided_slice %11 {offsets = [0, 0], sizes = [8, 128], strides = [1, 1]} : vector<16x128xf32> to vector<8x128xf32>
    %15 = tpu.concatenate %13, %14 in 0 : vector<8x128xf32>, vector<8x128xf32> -> vector<16x128xf32>
    %cst_11 = arith.constant dense<0.000000e+00> : vector<16x128xf32>
    %16 = tpu.matmul %3, %12, %cst_11 {dimension_numbers = #tpu.dot_dimension_numbers<[1], [0], [0], [1], [0, 0, 1, 1], [], []>} : vector<16x8xf32>, vector<8x128xf32>, vector<16x128xf32> -> vector<16x128xf32>
    %17 = arith.subf %16, %15 : vector<16x128xf32>
    %c0_12 = arith.constant 0 : index
    %c0_13 = arith.constant 0 : index
    %18 = vector.load %arg9[%c0_12, %c0_13] : memref<128x128xf32, #tpu.memory_space<vmem>>, vector<128x128xf32>
    %cst_14 = arith.constant dense<0.000000e+00> : vector<16x128xf32>
    %19 = tpu.matmul %17, %18, %cst_14 {dimension_numbers = #tpu.dot_dimension_numbers<[1], [0], [0], [1], [0, 0, 1, 1], [], []>} : vector<16x128xf32>, vector<128x128xf32>, vector<16x128xf32> -> vector<16x128xf32>
    %c0_15 = arith.constant 0 : index
    %c0_16 = arith.constant 0 : index
    %20 = vector.load %arg10[%c0_15, %c0_16] : memref<1x128xf32, #tpu.memory_space<vmem>>, vector<1x128xf32>
    %21 = vector.broadcast %20 : vector<1x128xf32> to vector<16x128xf32>
    %22 = arith.addf %19, %21 : vector<16x128xf32>
    %23 = arith.addf %9, %22 : vector<16x128xf32>
    %cst_17 = arith.constant 0.000000e+00 : f32
    %24 = vector.broadcast %cst_17 : f32 to vector<16x128xf32>
    %25 = arith.maximumf %23, %24 : vector<16x128xf32>
    %cst_18 = arith.constant dense<0.000000e+00> : vector<8x128xf32>
    %26 = tpu.matmul %1, %25, %cst_18 {dimension_numbers = #tpu.dot_dimension_numbers<[1], [0], [0], [1], [0, 0, 1, 1], [], []>} : vector<8x16xf32>, vector<16x128xf32>, vector<8x128xf32> -> vector<8x128xf32>
    %27 = vector.extract_strided_slice %25 {offsets = [8, 0], sizes = [8, 128], strides = [1, 1]} : vector<16x128xf32> to vector<8x128xf32>
    %28 = vector.extract_strided_slice %25 {offsets = [0, 0], sizes = [8, 128], strides = [1, 1]} : vector<16x128xf32> to vector<8x128xf32>
    %29 = tpu.concatenate %27, %28 in 0 : vector<8x128xf32>, vector<8x128xf32> -> vector<16x128xf32>
    %cst_19 = arith.constant dense<0.000000e+00> : vector<16x128xf32>
    %30 = tpu.matmul %3, %26, %cst_19 {dimension_numbers = #tpu.dot_dimension_numbers<[1], [0], [0], [1], [0, 0, 1, 1], [], []>} : vector<16x8xf32>, vector<8x128xf32>, vector<16x128xf32> -> vector<16x128xf32>
    %31 = arith.subf %30, %29 : vector<16x128xf32>
    %c0_20 = arith.constant 0 : index
    %c0_21 = arith.constant 0 : index
    %32 = vector.load %arg9[%c0_20, %c0_21] : memref<128x128xf32, #tpu.memory_space<vmem>>, vector<128x128xf32>
    %cst_22 = arith.constant dense<0.000000e+00> : vector<16x128xf32>
    %33 = tpu.matmul %31, %32, %cst_22 {dimension_numbers = #tpu.dot_dimension_numbers<[1], [0], [0], [1], [0, 0, 1, 1], [], []>} : vector<16x128xf32>, vector<128x128xf32>, vector<16x128xf32> -> vector<16x128xf32>
    %c0_23 = arith.constant 0 : index
    %c0_24 = arith.constant 0 : index
    %34 = vector.load %arg10[%c0_23, %c0_24] : memref<1x128xf32, #tpu.memory_space<vmem>>, vector<1x128xf32>
    %35 = vector.broadcast %34 : vector<1x128xf32> to vector<16x128xf32>
    %36 = arith.addf %33, %35 : vector<16x128xf32>
    %37 = arith.addf %9, %36 : vector<16x128xf32>
    %cst_25 = arith.constant 0.000000e+00 : f32
    %38 = vector.broadcast %cst_25 : f32 to vector<16x128xf32>
    %39 = arith.maximumf %37, %38 : vector<16x128xf32>
    %cst_26 = arith.constant dense<0.000000e+00> : vector<8x128xf32>
    %40 = tpu.matmul %1, %39, %cst_26 {dimension_numbers = #tpu.dot_dimension_numbers<[1], [0], [0], [1], [0, 0, 1, 1], [], []>} : vector<8x16xf32>, vector<16x128xf32>, vector<8x128xf32> -> vector<8x128xf32>
    %41 = vector.extract_strided_slice %39 {offsets = [8, 0], sizes = [8, 128], strides = [1, 1]} : vector<16x128xf32> to vector<8x128xf32>
    %42 = vector.extract_strided_slice %39 {offsets = [0, 0], sizes = [8, 128], strides = [1, 1]} : vector<16x128xf32> to vector<8x128xf32>
    %43 = tpu.concatenate %41, %42 in 0 : vector<8x128xf32>, vector<8x128xf32> -> vector<16x128xf32>
    %cst_27 = arith.constant dense<0.000000e+00> : vector<16x128xf32>
    %44 = tpu.matmul %3, %40, %cst_27 {dimension_numbers = #tpu.dot_dimension_numbers<[1], [0], [0], [1], [0, 0, 1, 1], [], []>} : vector<16x8xf32>, vector<8x128xf32>, vector<16x128xf32> -> vector<16x128xf32>
    %45 = arith.subf %44, %43 : vector<16x128xf32>
    %c0_28 = arith.constant 0 : index
    %c0_29 = arith.constant 0 : index
    %46 = vector.load %arg9[%c0_28, %c0_29] : memref<128x128xf32, #tpu.memory_space<vmem>>, vector<128x128xf32>
    %cst_30 = arith.constant dense<0.000000e+00> : vector<16x128xf32>
    %47 = tpu.matmul %45, %46, %cst_30 {dimension_numbers = #tpu.dot_dimension_numbers<[1], [0], [0], [1], [0, 0, 1, 1], [], []>} : vector<16x128xf32>, vector<128x128xf32>, vector<16x128xf32> -> vector<16x128xf32>
    %c0_31 = arith.constant 0 : index
    %c0_32 = arith.constant 0 : index
    %48 = vector.load %arg10[%c0_31, %c0_32] : memref<1x128xf32, #tpu.memory_space<vmem>>, vector<1x128xf32>
    %49 = vector.broadcast %48 : vector<1x128xf32> to vector<16x128xf32>
    %50 = arith.addf %47, %49 : vector<16x128xf32>
    %51 = arith.addf %9, %50 : vector<16x128xf32>
    %cst_33 = arith.constant 0.000000e+00 : f32
    %52 = vector.broadcast %cst_33 : f32 to vector<16x128xf32>
    %53 = arith.maximumf %51, %52 : vector<16x128xf32>
    %cst_34 = arith.constant dense<0.000000e+00> : vector<8x128xf32>
    %54 = tpu.matmul %1, %53, %cst_34 {dimension_numbers = #tpu.dot_dimension_numbers<[1], [0], [0], [1], [0, 0, 1, 1], [], []>} : vector<8x16xf32>, vector<16x128xf32>, vector<8x128xf32> -> vector<8x128xf32>
    %c0_35 = arith.constant 0 : index
    %c0_36 = arith.constant 0 : index
    %55 = vector.load %arg3[%c0_35, %c0_36] : memref<8x128xf32, #tpu.memory_space<vmem>>, vector<8x128xf32>
    %c0_37 = arith.constant 0 : index
    %c0_38 = arith.constant 0 : index
    %56 = vector.load %arg11[%c0_37, %c0_38] : memref<128x128xf32, #tpu.memory_space<vmem>>, vector<128x128xf32>
    %cst_39 = arith.constant dense<0.000000e+00> : vector<8x128xf32>
    %57 = tpu.matmul %55, %56, %cst_39 {dimension_numbers = #tpu.dot_dimension_numbers<[1], [0], [0], [1], [0, 0, 1, 1], [], []>} : vector<8x128xf32>, vector<128x128xf32>, vector<8x128xf32> -> vector<8x128xf32>
    %c0_40 = arith.constant 0 : index
    %c0_41 = arith.constant 0 : index
    %58 = vector.load %arg12[%c0_40, %c0_41] : memref<1x128xf32, #tpu.memory_space<vmem>>, vector<1x128xf32>
    %59 = vector.broadcast %58 : vector<1x128xf32> to vector<8x128xf32>
    %60 = arith.addf %57, %59 : vector<8x128xf32>
    %61 = arith.addf %60, %54 : vector<8x128xf32>
    %c0_42 = arith.constant 0 : index
    %c0_43 = arith.constant 0 : index
    %62 = vector.load %arg13[%c0_42, %c0_43] : memref<128x128xf32, #tpu.memory_space<vmem>>, vector<128x128xf32>
    %cst_44 = arith.constant dense<0.000000e+00> : vector<8x128xf32>
    %63 = tpu.matmul %61, %62, %cst_44 {dimension_numbers = #tpu.dot_dimension_numbers<[1], [0], [0], [1], [0, 0, 1, 1], [], []>} : vector<8x128xf32>, vector<128x128xf32>, vector<8x128xf32> -> vector<8x128xf32>
    %c0_45 = arith.constant 0 : index
    %c0_46 = arith.constant 0 : index
    %64 = vector.load %arg14[%c0_45, %c0_46] : memref<1x128xf32, #tpu.memory_space<vmem>>, vector<1x128xf32>
    %65 = vector.broadcast %64 : vector<1x128xf32> to vector<8x128xf32>
    %66 = arith.addf %63, %65 : vector<8x128xf32>
    %cst_47 = arith.constant 0.000000e+00 : f32
    %67 = vector.broadcast %cst_47 : f32 to vector<8x128xf32>
    %68 = arith.maximumf %66, %67 : vector<8x128xf32>
    %c0_48 = arith.constant 0 : index
    %c0_49 = arith.constant 0 : index
    %69 = vector.load %arg15[%c0_48, %c0_49] : memref<128x128xf32, #tpu.memory_space<vmem>>, vector<128x128xf32>
    %cst_50 = arith.constant dense<0.000000e+00> : vector<8x128xf32>
    %70 = tpu.matmul %68, %69, %cst_50 {dimension_numbers = #tpu.dot_dimension_numbers<[1], [0], [0], [1], [0, 0, 1, 1], [], []>} : vector<8x128xf32>, vector<128x128xf32>, vector<8x128xf32> -> vector<8x128xf32>
    %c0_51 = arith.constant 0 : index
    %c0_52 = arith.constant 0 : index
    %71 = vector.load %arg16[%c0_51, %c0_52] : memref<1x128xf32, #tpu.memory_space<vmem>>, vector<1x128xf32>
    %72 = vector.broadcast %71 : vector<1x128xf32> to vector<8x128xf32>
    %73 = arith.addf %70, %72 : vector<8x128xf32>
    %cst_53 = arith.constant dense<0.000000e+00> : vector<8x8xf32>
    %74 = tpu.matmul %73, %68, %cst_53 {dimension_numbers = #tpu.dot_dimension_numbers<[1], [1], [0], [0], [0, 0, 1, 0], [], []>} : vector<8x128xf32>, vector<8x128xf32>, vector<8x8xf32> -> vector<8x8xf32>
    %c0_54 = arith.constant 0 : index
    %c0_55 = arith.constant 0 : index
    %75 = vector.load %arg4[%c0_54, %c0_55] : memref<8x1xf32, #tpu.memory_space<vmem>>, vector<8x1xf32>
    %c0_56 = arith.constant 0 : index
    %c0_57 = arith.constant 0 : index
    %76 = vector.load %arg5[%c0_56, %c0_57] : memref<1x8xf32, #tpu.memory_space<vmem>>, vector<1x8xf32>
    %77 = vector.broadcast %75 : vector<8x1xf32> to vector<8x8xf32>
    %78 = vector.broadcast %76 : vector<1x8xf32> to vector<8x8xf32>
    %79 = arith.cmpf oeq, %77, %78 : vector<8x8xf32>
    %cst_58 = arith.constant 0.000000e+00 : f32
    %80 = vector.broadcast %cst_58 : f32 to vector<8x1xf32>
    %81 = arith.cmpf oge, %75, %80 : vector<8x1xf32>
    %82 = vector.broadcast %81 : vector<8x1xi1> to vector<8x8xi1>
    %83 = arith.andi %79, %82 : vector<8x8xi1>
    %cst_59 = arith.constant -1.000000e+09 : f32
    %84 = vector.broadcast %cst_59 : f32 to vector<8x8xf32>
    %85 = arith.select %83, %74, %84 : vector<8x8xi1>, vector<8x8xf32>
    %cst_60 = arith.constant dense<0xFF800000> : vector<8xf32>
    %86 = vector.multi_reduction <maximumf>, %85, %cst_60 [1] : vector<8x8xf32> to vector<8xf32>
    %87 = vector.shape_cast %86 : vector<8xf32> to vector<8x1xf32>
    %88 = vector.broadcast %87 : vector<8x1xf32> to vector<8x8xf32>
    %89 = arith.subf %85, %88 : vector<8x8xf32>
    %90 = math.exp %89 : vector<8x8xf32>
    %cst_61 = arith.constant dense<0.000000e+00> : vector<8xf32>
    %91 = vector.multi_reduction <add>, %90, %cst_61 [1] : vector<8x8xf32> to vector<8xf32>
    %92 = vector.shape_cast %91 : vector<8xf32> to vector<8x1xf32>
    %93 = tpu.reciprocal %92 {approx = true} : vector<8x1xf32> -> vector<8x1xf32>
    %94 = vector.broadcast %93 : vector<8x1xf32> to vector<8x8xf32>
    %95 = arith.mulf %90, %94 : vector<8x8xf32>
    %cst_62 = arith.constant dense<0.000000e+00> : vector<8x128xf32>
    %96 = tpu.matmul %95, %68, %cst_62 {dimension_numbers = #tpu.dot_dimension_numbers<[1], [0], [0], [1], [0, 0, 1, 1], [], []>} : vector<8x8xf32>, vector<8x128xf32>, vector<8x128xf32> -> vector<8x128xf32>
    %c0_63 = arith.constant 0 : index
    %c0_64 = arith.constant 0 : index
    %97 = vector.load %arg17[%c0_63, %c0_64] : memref<128x128xf32, #tpu.memory_space<vmem>>, vector<128x128xf32>
    %cst_65 = arith.constant dense<0.000000e+00> : vector<8x128xf32>
    %98 = tpu.matmul %96, %97, %cst_65 {dimension_numbers = #tpu.dot_dimension_numbers<[1], [0], [0], [1], [0, 0, 1, 1], [], []>} : vector<8x128xf32>, vector<128x128xf32>, vector<8x128xf32> -> vector<8x128xf32>
    %c0_66 = arith.constant 0 : index
    %c0_67 = arith.constant 0 : index
    %99 = vector.load %arg18[%c0_66, %c0_67] : memref<1x128xf32, #tpu.memory_space<vmem>>, vector<1x128xf32>
    %100 = vector.broadcast %99 : vector<1x128xf32> to vector<8x128xf32>
    %101 = arith.addf %98, %100 : vector<8x128xf32>
    %cst_68 = arith.constant 0.000000e+00 : f32
    %102 = vector.broadcast %cst_68 : f32 to vector<8x128xf32>
    %103 = arith.maximumf %101, %102 : vector<8x128xf32>
    %c0_69 = arith.constant 0 : index
    %c0_70 = arith.constant 0 : index
    %104 = vector.load %arg6[%c0_69, %c0_70] : memref<2x8xf32, #tpu.memory_space<vmem>>, vector<2x8xf32>
    %105 = arith.addf %68, %103 : vector<8x128xf32>
    %cst_71 = arith.constant dense<0.000000e+00> : vector<2x128xf32>
    %106 = tpu.matmul %104, %105, %cst_71 {dimension_numbers = #tpu.dot_dimension_numbers<[1], [0], [0], [1], [0, 0, 1, 1], [], []>} : vector<2x8xf32>, vector<8x128xf32>, vector<2x128xf32> -> vector<2x128xf32>
    %c0_72 = arith.constant 0 : index
    %c0_73 = arith.constant 0 : index
    %107 = vector.load %arg19[%c0_72, %c0_73] : memref<2x128xf32, #tpu.memory_space<vmem>>, vector<2x128xf32>
    tpu.vector_store %arg19[%c0_72, %c0_73], %106 {strides = array<i32>} : memref<2x128xf32, #tpu.memory_space<vmem>>, vector<2x128xf32>,
    return
  }
}

</mosaic_0001>

<llo_original>
// kernel: tpu_custom_call.1
$region0: #{tpu_custom_call.1}
  #allocation0 [shape = 'u32[]', space=smem, size = 0x4, offset = 0x4, fixed_abs, tag = 'smem constant byte address 0x4 - core index']
  #allocation1 [shape = 'u32[144,128]{1,0:T(1,128)}', space=vmem, size = 0x12000, scoped, tag = 'internal scratch']
  %s0 = inlined_call_operand.hbm [shape: f32[16,128], index: 0, kind: input, shape index: {}]
  %s1 = inlined_call_operand.hbm [shape: bf16[8,16], index: 1, kind: input, shape index: {}]
  %s2 = inlined_call_operand.hbm [shape: bf16[16,8], index: 2, kind: input, shape index: {}]
  %s3 = inlined_call_operand.hbm [shape: f32[8,128], index: 3, kind: input, shape index: {}]
  %s4 = inlined_call_operand.hbm [shape: f32[8,1], index: 4, kind: input, shape index: {}]
  %s5 = inlined_call_operand.hbm [shape: f32[1,8], index: 5, kind: input, shape index: {}]
  %s6 = inlined_call_operand.hbm [shape: f32[2,8], index: 6, kind: input, shape index: {}]
  %s7 = inlined_call_operand.hbm [shape: f32[128,128], index: 7, kind: input, shape index: {}]
  %s8 = inlined_call_operand.hbm [shape: f32[1,128], index: 8, kind: input, shape index: {}]
  %s9 = inlined_call_operand.hbm [shape: f32[128,128], index: 9, kind: input, shape index: {}]
  %s10 = inlined_call_operand.hbm [shape: f32[1,128], index: 10, kind: input, shape index: {}]
  %s11 = inlined_call_operand.hbm [shape: f32[128,128], index: 11, kind: input, shape index: {}]
  %s12 = inlined_call_operand.hbm [shape: f32[1,128], index: 12, kind: input, shape index: {}]
  %s13 = inlined_call_operand.hbm [shape: f32[128,128], index: 13, kind: input, shape index: {}]
  %s14 = inlined_call_operand.hbm [shape: f32[1,128], index: 14, kind: input, shape index: {}]
  %s15 = inlined_call_operand.hbm [shape: f32[128,128], index: 15, kind: input, shape index: {}]
  %s16 = inlined_call_operand.hbm [shape: f32[1,128], index: 16, kind: input, shape index: {}]
  %s17 = inlined_call_operand.hbm [shape: f32[128,128], index: 17, kind: input, shape index: {}]
  %s18 = inlined_call_operand.hbm [shape: f32[1,128], index: 18, kind: input, shape index: {}]
  %s19 = inlined_call_operand.hbm [shape: f32[2,128], index: 19, kind: output, shape index: {}]
  %s20 = sld [smem:[#allocation0]]
  $region162: #{tpu_custom_call.1} parent=0
    _
  %s22 = ssub.s32 1, %s20
  %s23 = scalar_select 0, %s22, %s20
  $region1: #{tpu_custom_call.1} parent=0
    #allocation2 [shape = 'u8[8192]{0}', space=vmem, size = 0x2000, scoped, tag = 'input window, operand 0, single buffered']
    #allocation3 [shape = 's32[1]{0}', space=sflag, size = 0x4, scoped, tag = 'scoped memory for tpu_custom_call.1']
    #allocation4 [shape = 's32[1]{0}', space=sflag, size = 0x4, scoped, tag = 'scoped memory for tpu_custom_call.1']
    #allocation5 [shape = 'u8[2048]{0}', space=vmem, size = 0x800, scoped, tag = 'input window, operand 1, single buffered']
    #allocation6 [shape = 's32[1]{0}', space=sflag, size = 0x4, scoped, tag = 'scoped memory for tpu_custom_call.1']
    #allocation7 [shape = 'u8[4096]{0}', space=vmem, size = 0x1000, scoped, tag = 'input window, operand 2, single buffered']
    #allocation8 [shape = 'u8[4096]{0}', space=vmem, size = 0x1000, scoped, tag = 'input window, operand 3, single buffered']
    #allocation9 [shape = 's32[1]{0}', space=sflag, size = 0x4, scoped, tag = 'scoped memory for tpu_custom_call.1']
    #allocation10 [shape = 'u8[4096]{0}', space=vmem, size = 0x1000, scoped, tag = 'input window, operand 4, single buffered']
    #allocation11 [shape = 'u8[512]{0}', space=vmem, size = 0x400, scoped, tag = 'input window, operand 5, single buffered']
    #allocation12 [shape = 's32[1]{0}', space=sflag, size = 0x4, scoped, tag = 'scoped memory for tpu_custom_call.1']
    #allocation13 [shape = 'u8[1024]{0}', space=vmem, size = 0x400, scoped, tag = 'input window, operand 6, single buffered']
    #allocation14 [shape = 'u8[65536]{0}', space=vmem, size = 0x10000, scoped, tag = 'input window, operand 7, single buffered']
    #allocation15 [shape = 's32[1]{0}', space=sflag, size = 0x4, scoped, tag = 'scoped memory for tpu_custom_call.1']
    #allocation16 [shape = 'u8[512]{0}', space=vmem, size = 0x400, scoped, tag = 'input window, operand 8, single buffered']
    #allocation17 [shape = 'u8[65536]{0}', space=vmem, size = 0x10000, scoped, tag = 'input window, operand 9, single buffered']
    #allocation18 [shape = 's32[1]{0}', space=sflag, size = 0x4, scoped, tag = 'scoped memory for tpu_custom_call.1']
    #allocation19 [shape = 'u8[512]{0}', space=vmem, size = 0x400, scoped, tag = 'input window, operand 10, single buffered']
    #allocation20 [shape = 'u8[65536]{0}', space=vmem, size = 0x10000, scoped, tag = 'input window, operand 11, single buffered']
    #allocation21 [shape = 's32[1]{0}', space=sflag, size = 0x4, scoped, tag = 'scoped memory for tpu_custom_call.1']
    #allocation22 [shape = 'u8[512]{0}', space=vmem, size = 0x400, scoped, tag = 'input window, operand 12, single buffered']
    #allocation23 [shape = 'u8[65536]{0}', space=vmem, size = 0x10000, scoped, tag = 'input window, operand 13, single buffered']
    #allocation24 [shape = 's32[1]{0}', space=sflag, size = 0x4, scoped, tag = 'scoped memory for tpu_custom_call.1']
    #allocation25 [shape = 'u8[512]{0}', space=vmem, size = 0x400, scoped, tag = 'input window, operand 14, single buffered']
    #allocation26 [shape = 'u8[65536]{0}', space=vmem, size = 0x10000, scoped, tag = 'input window, operand 15, single buffered']
    #allocation27 [shape = 's32[1]{0}', space=sflag, size = 0x4, scoped, tag = 'scoped memory for tpu_custom_call.1']
    #allocation28 [shape = 'u8[512]{0}', space=vmem, size = 0x400, scoped, tag = 'input window, operand 16, single buffered']
    #allocation29 [shape = 'u8[65536]{0}', space=vmem, size = 0x10000, scoped, tag = 'input window, operand 17, single buffered']
    #allocation30 [shape = 's32[1]{0}', space=sflag, size = 0x4, scoped, tag = 'scoped memory for tpu_custom_call.1']
    #allocation31 [shape = 'u8[512]{0}', space=vmem, size = 0x400, scoped, tag = 'input window, operand 18, single buffered']
    #allocation32 [shape = 'u8[1024]{0}', space=vmem, size = 0x400, scoped, tag = 'output window, operand 0, single buffered']
    %24 = vsyncpa [#allocation3], 0
    %25 = vsyncpa [#allocation6], 0
    %26 = vsyncpa [#allocation9], 0
    %27 = vsyncpa [#allocation12], 0
    %28 = vsyncpa [#allocation15], 0
    %29 = vsyncpa [#allocation18], 0
    %30 = vsyncpa [#allocation21], 0
    %31 = vsyncpa [#allocation24], 0
    %32 = vsyncpa [#allocation27], 0
    %33 = vsyncpa [#allocation30], 0
    %34 = vsyncpa [#allocation4], 0
    // Predicated region
    $region2: #{tpu_custom_call.1} parent=1 // pred_check
      _
    $region3: #{tpu_custom_call.1} parent=1 // pred_check_branch
      %36 = sbr.rel (0) target = $region5
    $region4: #{tpu_custom_call.1} parent=1 // pred_region
      %s38 = ssub.s32 256, 256
      %39 = vsyncadd [#allocation3], %s38
      %s40 = sshll.u32 [#allocation2], 4
      %s41 = int_to_ptr.vmem [resolvable:$true] %s40
      %46 = dma.hbm_to_vmem [thread:$0]  %s0, 256, %s41, [#allocation3], 128, 128, 8
    $region5: #{tpu_custom_call.1} parent=1 // pred_fallthru
      _
    // Predicated region
    $region6: #{tpu_custom_call.1} parent=1 // pred_check
      _
    $region7: #{tpu_custom_call.1} parent=1 // pred_check_branch
      %48 = sbr.rel (0) target = $region9
    $region8: #{tpu_custom_call.1} parent=1 // pred_region
      %s50 = ssub.s32 64, 64
      %51 = vsyncadd [#allocation6], %s50
      %s53 = sshll.u32 [#allocation5], 4
      %s54 = int_to_ptr.vmem [resolvable:$true] %s53
      %56 = dma.hbm_to_vmem [thread:$0]  %s1, 64, %s54, [#allocation6]
    $region9: #{tpu_custom_call.1} parent=1 // pred_fallthru
      _
    // Predicated region
    $region10: #{tpu_custom_call.1} parent=1 // pred_check
      _
    $region11: #{tpu_custom_call.1} parent=1 // pred_check_branch
      %58 = sbr.rel (0) target = $region13
    $region12: #{tpu_custom_call.1} parent=1 // pred_region
      %s60 = ssub.s32 128, 128
      %61 = vsyncadd [#allocation6], %s60
      %s62 = sshll.u32 [#allocation7], 4
      %s63 = int_to_ptr.vmem [resolvable:$true] %s62
      %68 = dma.hbm_to_vmem [thread:$0]  %s2, 128, %s63, [#allocation6], 64, 64, 4
    $region13: #{tpu_custom_call.1} parent=1 // pred_fallthru
      _
    // Predicated region
    $region14: #{tpu_custom_call.1} parent=1 // pred_check
      _
    $region15: #{tpu_custom_call.1} parent=1 // pred_check_branch
      %70 = sbr.rel (0) target = $region17
    $region16: #{tpu_custom_call.1} parent=1 // pred_region
      %s72 = ssub.s32 128, 128
      %73 = vsyncadd [#allocation9], %s72
      %s75 = sshll.u32 [#allocation8], 4
      %s76 = int_to_ptr.vmem [resolvable:$true] %s75
      %78 = dma.hbm_to_vmem [thread:$0]  %s3, 128, %s76, [#allocation9]
    $region17: #{tpu_custom_call.1} parent=1 // pred_fallthru
      _
    // Predicated region
    $region18: #{tpu_custom_call.1} parent=1 // pred_check
      _
    $region19: #{tpu_custom_call.1} parent=1 // pred_check_branch
      %80 = sbr.rel (0) target = $region21
    $region20: #{tpu_custom_call.1} parent=1 // pred_region
      %s82 = ssub.s32 128, 128
      %83 = vsyncadd [#allocation9], %s82
      %s85 = sshll.u32 [#allocation10], 4
      %s86 = int_to_ptr.vmem [resolvable:$true] %s85
      %88 = dma.hbm_to_vmem [thread:$0]  %s4, 128, %s86, [#allocation9]
    $region21: #{tpu_custom_call.1} parent=1 // pred_fallthru
      _
    // Predicated region
    $region22: #{tpu_custom_call.1} parent=1 // pred_check
      _
    $region23: #{tpu_custom_call.1} parent=1 // pred_check_branch
      %90 = sbr.rel (0) target = $region25
    $region24: #{tpu_custom_call.1} parent=1 // pred_region
      %s92 = ssub.s32 16, 16
      %93 = vsyncadd [#allocation12], %s92
      %s95 = sshll.u32 [#allocation11], 4
      %s96 = int_to_ptr.vmem [resolvable:$true] %s95
      %98 = dma.hbm_to_vmem [thread:$0]  %s5, 16, %s96, [#allocation12]
    $region25: #{tpu_custom_call.1} parent=1 // pred_fallthru
      _
    // Predicated region
    $region26: #{tpu_custom_call.1} parent=1 // pred_check
      _
    $region27: #{tpu_custom_call.1} parent=1 // pred_check_branch
      %100 = sbr.rel (0) target = $region29
    $region28: #{tpu_custom_call.1} parent=1 // pred_region
      %s102 = ssub.s32 32, 32
      %103 = vsyncadd [#allocation12], %s102
      %s105 = sshll.u32 [#allocation13], 4
      %s106 = int_to_ptr.vmem [resolvable:$true] %s105
      %108 = dma.hbm_to_vmem [thread:$0]  %s6, 32, %s106, [#allocation12]
    $region29: #{tpu_custom_call.1} parent=1 // pred_fallthru
      _
    // Predicated region
    $region30: #{tpu_custom_call.1} parent=1 // pred_check
      _
    $region31: #{tpu_custom_call.1} parent=1 // pred_check_branch
      %110 = sbr.rel (0) target = $region33
    $region32: #{tpu_custom_call.1} parent=1 // pred_region
      %s112 = ssub.s32 2048, 2048
      %113 = vsyncadd [#allocation15], %s112
      %s114 = sshll.u32 [#allocation14], 4
      %s115 = int_to_ptr.vmem [resolvable:$true] %s114
      %120 = dma.hbm_to_vmem [thread:$0]  %s7, 2048, %s115, [#allocation15], 128, 128, 8
    $region33: #{tpu_custom_call.1} parent=1 // pred_fallthru
      _
    // Predicated region
    $region34: #{tpu_custom_call.1} parent=1 // pred_check
      _
    $region35: #{tpu_custom_call.1} parent=1 // pred_check_branch
      %122 = sbr.rel (0) target = $region37
    $region36: #{tpu_custom_call.1} parent=1 // pred_region
      %s124 = ssub.s32 16, 16
      %125 = vsyncadd [#allocation15], %s124
      %s127 = sshll.u32 [#allocation16], 4
      %s128 = int_to_ptr.vmem [resolvable:$true] %s127
      %130 = dma.hbm_to_vmem [thread:$0]  %s8, 16, %s128, [#allocation15]
    $region37: #{tpu_custom_call.1} parent=1 // pred_fallthru
      _
    // Predicated region
    $region38: #{tpu_custom_call.1} parent=1 // pred_check
      _
    $region39: #{tpu_custom_call.1} parent=1 // pred_check_branch
      %132 = sbr.rel (0) target = $region41
    $region40: #{tpu_custom_call.1} parent=1 // pred_region
      %s134 = ssub.s32 2048, 2048
      %135 = vsyncadd [#allocation18], %s134
      %s136 = sshll.u32 [#allocation17], 4
      %s137 = int_to_ptr.vmem [resolvable:$true] %s136
      %142 = dma.hbm_to_vmem [thread:$0]  %s9, 2048, %s137, [#allocation18], 128, 128, 8
    $region41: #{tpu_custom_call.1} parent=1 // pred_fallthru
      _
    // Predicated region
    $region42: #{tpu_custom_call.1} parent=1 // pred_check
      _
    $region43: #{tpu_custom_call.1} parent=1 // pred_check_branch
      %144 = sbr.rel (0) target = $region45
    $region44: #{tpu_custom_call.1} parent=1 // pred_region
      %s146 = ssub.s32 16, 16
      %147 = vsyncadd [#allocation18], %s146
      %s149 = sshll.u32 [#allocation19], 4
      %s150 = int_to_ptr.vmem [resolvable:$true] %s149
      %152 = dma.hbm_to_vmem [thread:$0]  %s10, 16, %s150, [#allocation18]
    $region45: #{tpu_custom_call.1} parent=1 // pred_fallthru
      _
    // Predicated region
    $region46: #{tpu_custom_call.1} parent=1 // pred_check
      _
    $region47: #{tpu_custom_call.1} parent=1 // pred_check_branch
      %154 = sbr.rel (0) target = $region49
    $region48: #{tpu_custom_call.1} parent=1 // pred_region
      %s156 = ssub.s32 2048, 2048
      %157 = vsyncadd [#allocation21], %s156
      %s158 = sshll.u32 [#allocation20], 4
      %s159 = int_to_ptr.vmem [resolvable:$true] %s158
      %164 = dma.hbm_to_vmem [thread:$0]  %s11, 2048, %s159, [#allocation21], 128, 128, 8
    $region49: #{tpu_custom_call.1} parent=1 // pred_fallthru
      _
    // Predicated region
    $region50: #{tpu_custom_call.1} parent=1 // pred_check
      _
    $region51: #{tpu_custom_call.1} parent=1 // pred_check_branch
      %166 = sbr.rel (0) target = $region53
    $region52: #{tpu_custom_call.1} parent=1 // pred_region
      %s168 = ssub.s32 16, 16
      %169 = vsyncadd [#allocation21], %s168
      %s171 = sshll.u32 [#allocation22], 4
      %s172 = int_to_ptr.vmem [resolvable:$true] %s171
      %174 = dma.hbm_to_vmem [thread:$0]  %s12, 16, %s172, [#allocation21]
    $region53: #{tpu_custom_call.1} parent=1 // pred_fallthru
      _
    // Predicated region
    $region54: #{tpu_custom_call.1} parent=1 // pred_check
      _
    $region55: #{tpu_custom_call.1} parent=1 // pred_check_branch
      %176 = sbr.rel (0) target = $region57
    $region56: #{tpu_custom_call.1} parent=1 // pred_region
      %s178 = ssub.s32 2048, 2048
      %179 = vsyncadd [#allocation24], %s178
      %s180 = sshll.u32 [#allocation23], 4
      %s181 = int_to_ptr.vmem [resolvable:$true] %s180
      %186 = dma.hbm_to_vmem [thread:$0]  %s13, 2048, %s181, [#allocation24], 128, 128, 8
    $region57: #{tpu_custom_call.1} parent=1 // pred_fallthru
      _
    // Predicated region
    $region58: #{tpu_custom_call.1} parent=1 // pred_check
      _
    $region59: #{tpu_custom_call.1} parent=1 // pred_check_branch
      %188 = sbr.rel (0) target = $region61
    $region60: #{tpu_custom_call.1} parent=1 // pred_region
      %s190 = ssub.s32 16, 16
      %191 = vsyncadd [#allocation24], %s190
      %s193 = sshll.u32 [#allocation25], 4
      %s194 = int_to_ptr.vmem [resolvable:$true] %s193
      %196 = dma.hbm_to_vmem [thread:$0]  %s14, 16, %s194, [#allocation24]
    $region61: #{tpu_custom_call.1} parent=1 // pred_fallthru
      _
    // Predicated region
    $region62: #{tpu_custom_call.1} parent=1 // pred_check
      _
    $region63: #{tpu_custom_call.1} parent=1 // pred_check_branch
      %198 = sbr.rel (0) target = $region65
    $region64: #{tpu_custom_call.1} parent=1 // pred_region
      %s200 = ssub.s32 2048, 2048
      %201 = vsyncadd [#allocation27], %s200
      %s202 = sshll.u32 [#allocation26], 4
      %s203 = int_to_ptr.vmem [resolvable:$true] %s202
      %208 = dma.hbm_to_vmem [thread:$0]  %s15, 2048, %s203, [#allocation27], 128, 128, 8
    $region65: #{tpu_custom_call.1} parent=1 // pred_fallthru
      _
    // Predicated region
    $region66: #{tpu_custom_call.1} parent=1 // pred_check
      _
    $region67: #{tpu_custom_call.1} parent=1 // pred_check_branch
      %210 = sbr.rel (0) target = $region69
    $region68: #{tpu_custom_call.1} parent=1 // pred_region
      %s212 = ssub.s32 16, 16
      %213 = vsyncadd [#allocation27], %s212
      %s215 = sshll.u32 [#allocation28], 4
      %s216 = int_to_ptr.vmem [resolvable:$true] %s215
      %218 = dma.hbm_to_vmem [thread:$0]  %s16, 16, %s216, [#allocation27]
    $region69: #{tpu_custom_call.1} parent=1 // pred_fallthru
      _
    // Predicated region
    $region70: #{tpu_custom_call.1} parent=1 // pred_check
      _
    $region71: #{tpu_custom_call.1} parent=1 // pred_check_branch
      %220 = sbr.rel (0) target = $region73
    $region72: #{tpu_custom_call.1} parent=1 // pred_region
      %s222 = ssub.s32 2048, 2048
      %223 = vsyncadd [#allocation30], %s222
      %s224 = sshll.u32 [#allocation29], 4
      %s225 = int_to_ptr.vmem [resolvable:$true] %s224
      %230 = dma.hbm_to_vmem [thread:$0]  %s17, 2048, %s225, [#allocation30], 128, 128, 8
    $region73: #{tpu_custom_call.1} parent=1 // pred_fallthru
      _
    // Predicated region
    $region74: #{tpu_custom_call.1} parent=1 // pred_check
      _
    $region75: #{tpu_custom_call.1} parent=1 // pred_check_branch
      %232 = sbr.rel (0) target = $region77
    $region76: #{tpu_custom_call.1} parent=1 // pred_region
      %s234 = ssub.s32 16, 16
      %235 = vsyncadd [#allocation30], %s234
      %s237 = sshll.u32 [#allocation31], 4
      %s238 = int_to_ptr.vmem [resolvable:$true] %s237
      %240 = dma.hbm_to_vmem [thread:$0]  %s18, 16, %s238, [#allocation30]
    $region77: #{tpu_custom_call.1} parent=1 // pred_fallthru
      _
    // Predicated region
    $region78: #{tpu_custom_call.1} parent=1 // pred_check
      _
    $region79: #{tpu_custom_call.1} parent=1 // pred_check_branch
      %242 = sbr.rel (0) target = $region81
    $region80: #{tpu_custom_call.1} parent=1 // pred_region
      %243 = dma.done [#allocation3], 256
    $region81: #{tpu_custom_call.1} parent=1 // pred_fallthru
      _
    // Predicated region
    $region82: #{tpu_custom_call.1} parent=1 // pred_check
      _
    $region83: #{tpu_custom_call.1} parent=1 // pred_check_branch
      %245 = sbr.rel (0) target = $region85
    $region84: #{tpu_custom_call.1} parent=1 // pred_region
      %246 = dma.done [#allocation6], 64
    $region85: #{tpu_custom_call.1} parent=1 // pred_fallthru
      _
    // Predicated region
    $region86: #{tpu_custom_call.1} parent=1 // pred_check
      _
    $region87: #{tpu_custom_call.1} parent=1 // pred_check_branch
      %248 = sbr.rel (0) target = $region89
    $region88: #{tpu_custom_call.1} parent=1 // pred_region
      %249 = dma.done [#allocation6], 128
    $region89: #{tpu_custom_call.1} parent=1 // pred_fallthru
      _
    // Predicated region
    $region90: #{tpu_custom_call.1} parent=1 // pred_check
      _
    $region91: #{tpu_custom_call.1} parent=1 // pred_check_branch
      %251 = sbr.rel (0) target = $region93
    $region92: #{tpu_custom_call.1} parent=1 // pred_region
      %252 = dma.done [#allocation9], 128
    $region93: #{tpu_custom_call.1} parent=1 // pred_fallthru
      _
    // Predicated region
    $region94: #{tpu_custom_call.1} parent=1 // pred_check
      _
    $region95: #{tpu_custom_call.1} parent=1 // pred_check_branch
      %254 = sbr.rel (0) target = $region97
    $region96: #{tpu_custom_call.1} parent=1 // pred_region
      %255 = dma.done [#allocation9], 128
    $region97: #{tpu_custom_call.1} parent=1 // pred_fallthru
      _
    // Predicated region
    $region98: #{tpu_custom_call.1} parent=1 // pred_check
      _
    $region99: #{tpu_custom_call.1} parent=1 // pred_check_branch
      %257 = sbr.rel (0) target = $region101
    $region100: #{tpu_custom_call.1} parent=1 // pred_region
      %258 = dma.done [#allocation12], 16
    $region101: #{tpu_custom_call.1} parent=1 // pred_fallthru
      _
    // Predicated region
    $region102: #{tpu_custom_call.1} parent=1 // pred_check
      _
    $region103: #{tpu_custom_call.1} parent=1 // pred_check_branch
      %260 = sbr.rel (0) target = $region105
    $region104: #{tpu_custom_call.1} parent=1 // pred_region
      %261 = dma.done [#allocation12], 32
    $region105: #{tpu_custom_call.1} parent=1 // pred_fallthru
      _
    // Predicated region
    $region106: #{tpu_custom_call.1} parent=1 // pred_check
      _
    $region107: #{tpu_custom_call.1} parent=1 // pred_check_branch
      %263 = sbr.rel (0) target = $region109
    $region108: #{tpu_custom_call.1} parent=1 // pred_region
      %264 = dma.done [#allocation15], 2048
    $region109: #{tpu_custom_call.1} parent=1 // pred_fallthru
      _
    // Predicated region
    $region110: #{tpu_custom_call.1} parent=1 // pred_check
      _
    $region111: #{tpu_custom_call.1} parent=1 // pred_check_branch
      %266 = sbr.rel (0) target = $region113
    $region112: #{tpu_custom_call.1} parent=1 // pred_region
      %267 = dma.done [#allocation15], 16
    $region113: #{tpu_custom_call.1} parent=1 // pred_fallthru
      _
    // Predicated region
    $region114: #{tpu_custom_call.1} parent=1 // pred_check
      _
    $region115: #{tpu_custom_call.1} parent=1 // pred_check_branch
      %269 = sbr.rel (0) target = $region117
    $region116: #{tpu_custom_call.1} parent=1 // pred_region
      %270 = dma.done [#allocation18], 2048
    $region117: #{tpu_custom_call.1} parent=1 // pred_fallthru
      _
    // Predicated region
    $region118: #{tpu_custom_call.1} parent=1 // pred_check
      _
    $region119: #{tpu_custom_call.1} parent=1 // pred_check_branch
      %272 = sbr.rel (0) target = $region121
    $region120: #{tpu_custom_call.1} parent=1 // pred_region
      %273 = dma.done [#allocation18], 16
    $region121: #{tpu_custom_call.1} parent=1 // pred_fallthru
      _
    // Predicated region
    $region122: #{tpu_custom_call.1} parent=1 // pred_check
      _
    $region123: #{tpu_custom_call.1} parent=1 // pred_check_branch
      %275 = sbr.rel (0) target = $region125
    $region124: #{tpu_custom_call.1} parent=1 // pred_region
      %276 = dma.done [#allocation21], 2048
    $region125: #{tpu_custom_call.1} parent=1 // pred_fallthru
      _
    // Predicated region
    $region126: #{tpu_custom_call.1} parent=1 // pred_check
      _
    $region127: #{tpu_custom_call.1} parent=1 // pred_check_branch
      %278 = sbr.rel (0) target = $region129
    $region128: #{tpu_custom_call.1} parent=1 // pred_region
      %279 = dma.done [#allocation21], 16
    $region129: #{tpu_custom_call.1} parent=1 // pred_fallthru
      _
    // Predicated region
    $region130: #{tpu_custom_call.1} parent=1 // pred_check
      _
    $region131: #{tpu_custom_call.1} parent=1 // pred_check_branch
      %281 = sbr.rel (0) target = $region133
    $region132: #{tpu_custom_call.1} parent=1 // pred_region
      %282 = dma.done [#allocation24], 2048
    $region133: #{tpu_custom_call.1} parent=1 // pred_fallthru
      _
    // Predicated region
    $region134: #{tpu_custom_call.1} parent=1 // pred_check
      _
    $region135: #{tpu_custom_call.1} parent=1 // pred_check_branch
      %284 = sbr.rel (0) target = $region137
    $region136: #{tpu_custom_call.1} parent=1 // pred_region
      %285 = dma.done [#allocation24], 16
    $region137: #{tpu_custom_call.1} parent=1 // pred_fallthru
      _
    // Predicated region
    $region138: #{tpu_custom_call.1} parent=1 // pred_check
      _
    $region139: #{tpu_custom_call.1} parent=1 // pred_check_branch
      %287 = sbr.rel (0) target = $region141
    $region140: #{tpu_custom_call.1} parent=1 // pred_region
      %288 = dma.done [#allocation27], 2048
    $region141: #{tpu_custom_call.1} parent=1 // pred_fallthru
      _
    // Predicated region
    $region142: #{tpu_custom_call.1} parent=1 // pred_check
      _
    $region143: #{tpu_custom_call.1} parent=1 // pred_check_branch
      %290 = sbr.rel (0) target = $region145
    $region144: #{tpu_custom_call.1} parent=1 // pred_region
      %291 = dma.done [#allocation27], 16
    $region145: #{tpu_custom_call.1} parent=1 // pred_fallthru
      _
    // Predicated region
    $region146: #{tpu_custom_call.1} parent=1 // pred_check
      _
    $region147: #{tpu_custom_call.1} parent=1 // pred_check_branch
      %293 = sbr.rel (0) target = $region149
    $region148: #{tpu_custom_call.1} parent=1 // pred_region
      %294 = dma.done [#allocation30], 2048
    $region149: #{tpu_custom_call.1} parent=1 // pred_fallthru
      _
    // Predicated region
    $region150: #{tpu_custom_call.1} parent=1 // pred_check
      _
    $region151: #{tpu_custom_call.1} parent=1 // pred_check_branch
      %296 = sbr.rel (0) target = $region153
    $region152: #{tpu_custom_call.1} parent=1 // pred_region
      %297 = dma.done [#allocation30], 16
    $region153: #{tpu_custom_call.1} parent=1 // pred_fallthru
      _
    %v298 = vld [vmem:[#allocation5] sm:$0xf]
    %v299 = vunpack.c.l.bf16 %v298
    %v300 = vld [vmem:[#allocation7] sm:$0xf]
    %v301 = vld [vmem:[#allocation7 + $0x4] sm:$0xf]
    %v302 = vunpack.c.l.bf16 %v300
    %v303 = vunpack.c.l.bf16 %v301
    %v304 = vld [vmem:[#allocation2] sm:$0xff]
    %v305 = vld [vmem:[#allocation2 + $0x8] sm:$0xff]
    %v306 = vld [vmem:[#allocation14] sm:$0xff]
    %v307 = vld [vmem:[#allocation14 + $0x8] sm:$0xff]
    %v308 = vld [vmem:[#allocation14 + $0x10] sm:$0xff]
    %v309 = vld [vmem:[#allocation14 + $0x18] sm:$0xff]
    %v310 = vld [vmem:[#allocation14 + $0x20] sm:$0xff]
    %v311 = vld [vmem:[#allocation14 + $0x28] sm:$0xff]
    %v312 = vld [vmem:[#allocation14 + $0x30] sm:$0xff]
    %v313 = vld [vmem:[#allocation14 + $0x38] sm:$0xff]
    %v314 = vld [vmem:[#allocation14 + $0x40] sm:$0xff]
    %v315 = vld [vmem:[#allocation14 + $0x48] sm:$0xff]
    %v316 = vld [vmem:[#allocation14 + $0x50] sm:$0xff]
    %v317 = vld [vmem:[#allocation14 + $0x58] sm:$0xff]
    %v318 = vld [vmem:[#allocation14 + $0x60] sm:$0xff]
    %v319 = vld [vmem:[#allocation14 + $0x68] sm:$0xff]
    %v320 = vld [vmem:[#allocation14 + $0x70] sm:$0xff]
    %v321 = vld [vmem:[#allocation14 + $0x78] sm:$0xff]
    %v322 = vld [vmem:[#allocation16] sm:$0x1]
    %v324 = vlaneseq
    %v325 = vshrl.u32 %v324, 7
    %v326 = vsub.s32 0, %v325
    %v327 = vrot.slane %v322, %v326
    %329 = vmatprep.subr.mxu0 0.0
    %330 = vmatpush1.msra.mxu0 %v306
    %331 = vmatprep.subr.mxu0 0.0
    %332 = vmatpush1.msra.mxu0 %v307
    %333 = vmatprep.subr.mxu0 0.0
    %334 = vmatpush1.msra.mxu0 %v308
    %335 = vmatprep.subr.mxu0 0.0
    %336 = vmatpush1.msra.mxu0 %v309
    %337 = vmatprep.subr.mxu0 0.0
    %338 = vmatpush1.msra.mxu0 %v310
    %339 = vmatprep.subr.mxu0 0.0
    %340 = vmatpush1.msra.mxu0 %v311
    %341 = vmatprep.subr.mxu0 0.0
    %342 = vmatpush1.msra.mxu0 %v312
    %343 = vmatprep.subr.mxu0 0.0
    %344 = vmatpush1.msra.mxu0 %v313
    %345 = vmatprep.subr.mxu0 0.0
    %346 = vmatpush1.msra.mxu0 %v314
    %347 = vmatprep.subr.mxu0 0.0
    %348 = vmatpush1.msra.mxu0 %v315
    %349 = vmatprep.subr.mxu0 0.0
    %350 = vmatpush1.msra.mxu0 %v316
    %351 = vmatprep.subr.mxu0 0.0
    %352 = vmatpush1.msra.mxu0 %v317
    %353 = vmatprep.subr.mxu0 0.0
    %354 = vmatpush1.msra.mxu0 %v318
    %355 = vmatprep.subr.mxu0 0.0
    %356 = vmatpush1.msra.mxu0 %v319
    %357 = vmatprep.subr.mxu0 0.0
    %358 = vmatpush1.msra.mxu0 %v320
    %359 = vmatprep.subr.mxu0 0.0
    %360 = vmatpush1.msra.mxu0 %v321
    %361 = vmatprep.subr.mxu0 0.0
    %362 = vmatpush1.msra.mxu0 0.0
    %363 = vmatprep.subr.mxu0 0.0
    %364 = vmatpush1.msra.mxu0 0.0
    %365 = vmatprep.subr.mxu0 0.0
    %366 = vmatpush1.msra.mxu0 0.0
    %367 = vmatprep.subr.mxu0 0.0
    %368 = vmatpush1.msra.mxu0 0.0
    %369 = vmatprep.subr.mxu0 0.0
    %370 = vmatpush1.msra.mxu0 0.0
    %371 = vmatprep.subr.mxu0 0.0
    %372 = vmatpush1.msra.mxu0 0.0
    %373 = vmatprep.subr.mxu0 0.0
    %374 = vmatpush1.msra.mxu0 0.0
    %375 = vmatprep.subr.mxu0 0.0
    %376 = vmatpush1.msra.mxu0 0.0
    %377 = vmatprep.subr.mxu0 0.0
    %378 = vmatpush1.msra.mxu0 0.0
    %379 = vmatprep.subr.mxu0 0.0
    %380 = vmatpush1.msra.mxu0 0.0
    %381 = vmatprep.subr.mxu0 0.0
    %382 = vmatpush1.msra.mxu0 0.0
    %383 = vmatprep.subr.mxu0 0.0
    %384 = vmatpush1.msra.mxu0 0.0
    %385 = vmatprep.subr.mxu0 0.0
    %386 = vmatpush1.msra.mxu0 0.0
    %387 = vmatprep.subr.mxu0 0.0
    %388 = vmatpush1.msra.mxu0 0.0
    %389 = vmatprep.subr.mxu0 0.0
    %390 = vmatpush1.msra.mxu0 0.0
    %391 = vmatprep.subr.mxu0 0.0
    %392 = vmatpush1.msra.mxu0 0.0
    %393 = vmatprep.mubr.f32.mxu0 0.0
    %394 = vmatmul.mubr.f32.gmra.mrb[0].mxu0 %v304
    %v395 = vpop.f32.mrb[0].mxu0
    %v396 = vadd.f32 %v327, %v395
    %v397 = vpop.f32.mrb[0].mxu0
    %398 = vmatprep.mubr.f32.mxu0 0.0
    %399 = vmatmul.mubr.f32.gmra.mrb[0].mxu0 %v305
    %v400 = vpop.f32.mrb[0].mxu0
    %v401 = vadd.f32 %v327, %v400
    %v402 = vpop.f32.mrb[0].mxu0
    %403 = vdwg.mxu0
    %v404 = vmax.f32 %v396, 0.0
    %v405 = vmax.f32 %v401, 0.0
    %vm406 = vcmask 130048
    %v408 = vsel %vm406, %v299, 0
    %410 = vmatprep.subr.mxu0 0.0
    %411 = vmatpush1.msra.mxu0 %v404
    %412 = vmatprep.subr.mxu0 0.0
    %413 = vmatpush1.msra.mxu0 %v405
    %414 = vmatprep.subr.mxu0 0.0
    %415 = vmatpush1.msra.mxu0 0.0
    %416 = vmatprep.subr.mxu0 0.0
    %417 = vmatpush1.msra.mxu0 0.0
    %418 = vmatprep.subr.mxu0 0.0
    %419 = vmatpush1.msra.mxu0 0.0
    %420 = vmatprep.subr.mxu0 0.0
    %421 = vmatpush1.msra.mxu0 0.0
    %422 = vmatprep.subr.mxu0 0.0
    %423 = vmatpush1.msra.mxu0 0.0
    %424 = vmatprep.subr.mxu0 0.0
    %425 = vmatpush1.msra.mxu0 0.0
    %426 = vmatprep.subr.mxu0 0.0
    %427 = vmatpush1.msra.mxu0 0.0
    %428 = vmatprep.subr.mxu0 0.0
    %429 = vmatpush1.msra.mxu0 0.0
    %430 = vmatprep.subr.mxu0 0.0
    %431 = vmatpush1.msra.mxu0 0.0
    %432 = vmatprep.subr.mxu0 0.0
    %433 = vmatpush1.msra.mxu0 0.0
    %434 = vmatprep.subr.mxu0 0.0
    %435 = vmatpush1.msra.mxu0 0.0
    %436 = vmatprep.subr.mxu0 0.0
    %437 = vmatpush1.msra.mxu0 0.0
    %438 = vmatprep.subr.mxu0 0.0
    %439 = vmatpush1.msra.mxu0 0.0
    %440 = vmatprep.subr.mxu0 0.0
    %441 = vmatpush1.msra.mxu0 0.0
    %442 = vmatprep.subr.mxu0 0.0
    %443 = vmatpush1.msra.mxu0 0.0
    %444 = vmatprep.subr.mxu0 0.0
    %445 = vmatpush1.msra.mxu0 0.0
    %446 = vmatprep.subr.mxu0 0.0
    %447 = vmatpush1.msra.mxu0 0.0
    %448 = vmatprep.subr.mxu0 0.0
    %449 = vmatpush1.msra.mxu0 0.0
    %450 = vmatprep.subr.mxu0 0.0
    %451 = vmatpush1.msra.mxu0 0.0
    %452 = vmatprep.subr.mxu0 0.0
    %453 = vmatpush1.msra.mxu0 0.0
    %454 = vmatprep.subr.mxu0 0.0
    %455 = vmatpush1.msra.mxu0 0.0
    %456 = vmatprep.subr.mxu0 0.0
    %457 = vmatpush1.msra.mxu0 0.0
    %458 = vmatprep.subr.mxu0 0.0
    %459 = vmatpush1.msra.mxu0 0.0
    %460 = vmatprep.subr.mxu0 0.0
    %461 = vmatpush1.msra.mxu0 0.0
    %462 = vmatprep.subr.mxu0 0.0
    %463 = vmatpush1.msra.mxu0 0.0
    %464 = vmatprep.subr.mxu0 0.0
    %465 = vmatpush1.msra.mxu0 0.0
    %466 = vmatprep.subr.mxu0 0.0
    %467 = vmatpush1.msra.mxu0 0.0
    %468 = vmatprep.subr.mxu0 0.0
    %469 = vmatpush1.msra.mxu0 0.0
    %470 = vmatprep.subr.mxu0 0.0
    %471 = vmatpush1.msra.mxu0 0.0
    %472 = vmatprep.subr.mxu0 0.0
    %473 = vmatpush1.msra.mxu0 0.0
    %474 = vmatprep.mubr.f32.mxu0 0.0
    %475 = vmatmul.mubr.f32.gmra.mrb[0].mxu0 %v408
    %v476 = vpop.f32.mrb[0].mxu0
    %v477 = vadd.f32 0.0, %v476
    %v478 = vpop.f32.mrb[0].mxu0
    %479 = vdwg.mxu0
    %vm480 = vcmask 64512
    %v482 = vsel %vm480, %v302, 0
    %v485 = vsel %vm480, %v303, 0
    %487 = vmatprep.subr.mxu0 0.0
    %488 = vmatpush1.msra.mxu0 %v477
    %489 = vmatprep.subr.mxu0 0.0
    %490 = vmatpush1.msra.mxu0 0.0
    %491 = vmatprep.subr.mxu0 0.0
    %492 = vmatpush1.msra.mxu0 0.0
    %493 = vmatprep.subr.mxu0 0.0
    %494 = vmatpush1.msra.mxu0 0.0
    %495 = vmatprep.subr.mxu0 0.0
    %496 = vmatpush1.msra.mxu0 0.0
    %497 = vmatprep.subr.mxu0 0.0
    %498 = vmatpush1.msra.mxu0 0.0
    %499 = vmatprep.subr.mxu0 0.0
    %500 = vmatpush1.msra.mxu0 0.0
    %501 = vmatprep.subr.mxu0 0.0
    %502 = vmatpush1.msra.mxu0 0.0
    %503 = vmatprep.subr.mxu0 0.0
    %504 = vmatpush1.msra.mxu0 0.0
    %505 = vmatprep.subr.mxu0 0.0
    %506 = vmatpush1.msra.mxu0 0.0
    %507 = vmatprep.subr.mxu0 0.0
    %508 = vmatpush1.msra.mxu0 0.0
    %509 = vmatprep.subr.mxu0 0.0
    %510 = vmatpush1.msra.mxu0 0.0
    %511 = vmatprep.subr.mxu0 0.0
    %512 = vmatpush1.msra.mxu0 0.0
    %513 = vmatprep.subr.mxu0 0.0
    %514 = vmatpush1.msra.mxu0 0.0
    %515 = vmatprep.subr.mxu0 0.0
    %516 = vmatpush1.msra.mxu0 0.0
    %517 = vmatprep.subr.mxu0 0.0
    %518 = vmatpush1.msra.mxu0 0.0
    %519 = vmatprep.subr.mxu0 0.0
    %520 = vmatpush1.msra.mxu0 0.0
    %521 = vmatprep.subr.mxu0 0.0
    %522 = vmatpush1.msra.mxu0 0.0
    %523 = vmatprep.subr.mxu0 0.0
    %524 = vmatpush1.msra.mxu0 0.0
    %525 = vmatprep.subr.mxu0 0.0
    %526 = vmatpush1.msra.mxu0 0.0
    %527 = vmatprep.subr.mxu0 0.0
    %528 = vmatpush1.msra.mxu0 0.0
    %529 = vmatprep.subr.mxu0 0.0
    %530 = vmatpush1.msra.mxu0 0.0
    %531 = vmatprep.subr.mxu0 0.0
    %532 = vmatpush1.msra.mxu0 0.0
    %533 = vmatprep.subr.mxu0 0.0
    %534 = vmatpush1.msra.mxu0 0.0
    %535 = vmatprep.subr.mxu0 0.0
    %536 = vmatpush1.msra.mxu0 0.0
    %537 = vmatprep.subr.mxu0 0.0
    %538 = vmatpush1.msra.mxu0 0.0
    %539 = vmatprep.subr.mxu0 0.0
    %540 = vmatpush1.msra.mxu0 0.0
    %541 = vmatprep.subr.mxu0 0.0
    %542 = vmatpush1.msra.mxu0 0.0
    %543 = vmatprep.subr.mxu0 0.0
    %544 = vmatpush1.msra.mxu0 0.0
    %545 = vmatprep.subr.mxu0 0.0
    %546 = vmatpush1.msra.mxu0 0.0
    %547 = vmatprep.subr.mxu0 0.0
    %548 = vmatpush1.msra.mxu0 0.0
    %549 = vmatprep.subr.mxu0 0.0
    %550 = vmatpush1.msra.mxu0 0.0
    %551 = vmatprep.mubr.f32.mxu0 0.0
    %552 = vmatmul.mubr.f32.gmra.mrb[0].mxu0 %v482
    %v553 = vpop.f32.mrb[0].mxu0
    %v554 = vadd.f32 0.0, %v553
    %v555 = vpop.f32.mrb[0].mxu0
    %556 = vmatprep.mubr.f32.mxu0 0.0
    %557 = vmatmul.mubr.f32.gmra.mrb[0].mxu0 %v485
    %v558 = vpop.f32.mrb[0].mxu0
    %v559 = vadd.f32 0.0, %v558
    %v560 = vpop.f32.mrb[0].mxu0
    %561 = vdwg.mxu0
    %v562 = vsub.f32 %v554, %v405
    %v563 = vsub.f32 %v559, %v404
    %v564 = vld [vmem:[#allocation17] sm:$0xff]
    %v565 = vld [vmem:[#allocation17 + $0x8] sm:$0xff]
    %v566 = vld [vmem:[#allocation17 + $0x10] sm:$0xff]
    %v567 = vld [vmem:[#allocation17 + $0x18] sm:$0xff]
    %v568 = vld [vmem:[#allocation17 + $0x20] sm:$0xff]
    %v569 = vld [vmem:[#allocation17 + $0x28] sm:$0xff]
    %v570 = vld [vmem:[#allocation17 + $0x30] sm:$0xff]
    %v571 = vld [vmem:[#allocation17 + $0x38] sm:$0xff]
    %v572 = vld [vmem:[#allocation17 + $0x40] sm:$0xff]
    %v573 = vld [vmem:[#allocation17 + $0x48] sm:$0xff]
    %v574 = vld [vmem:[#allocation17 + $0x50] sm:$0xff]
    %v575 = vld [vmem:[#allocation17 + $0x58] sm:$0xff]
    %v576 = vld [vmem:[#allocation17 + $0x60] sm:$0xff]
    %v577 = vld [vmem:[#allocation17 + $0x68] sm:$0xff]
    %v578 = vld [vmem:[#allocation17 + $0x70] sm:$0xff]
    %v579 = vld [vmem:[#allocation17 + $0x78] sm:$0xff]
    %v580 = vld [vmem:[#allocation19] sm:$0x1]
    %v582 = vlaneseq
    %v583 = vshrl.u32 %v582, 7
    %v584 = vsub.s32 0, %v583
    %v585 = vrot.slane %v580, %v584
    %587 = vmatprep.subr.mxu0 0.0
    %588 = vmatpush1.msra.mxu0 %v564
    %589 = vmatprep.subr.mxu0 0.0
    %590 = vmatpush1.msra.mxu0 %v565
    %591 = vmatprep.subr.mxu0 0.0
    %592 = vmatpush1.msra.mxu0 %v566
    %593 = vmatprep.subr.mxu0 0.0
    %594 = vmatpush1.msra.mxu0 %v567
    %595 = vmatprep.subr.mxu0 0.0
    %596 = vmatpush1.msra.mxu0 %v568
    %597 = vmatprep.subr.mxu0 0.0
    %598 = vmatpush1.msra.mxu0 %v569
    %599 = vmatprep.subr.mxu0 0.0
    %600 = vmatpush1.msra.mxu0 %v570
    %601 = vmatprep.subr.mxu0 0.0
    %602 = vmatpush1.msra.mxu0 %v571
    %603 = vmatprep.subr.mxu0 0.0
    %604 = vmatpush1.msra.mxu0 %v572
    %605 = vmatprep.subr.mxu0 0.0
    %606 = vmatpush1.msra.mxu0 %v573
    %607 = vmatprep.subr.mxu0 0.0
    %608 = vmatpush1.msra.mxu0 %v574
    %609 = vmatprep.subr.mxu0 0.0
    %610 = vmatpush1.msra.mxu0 %v575
    %611 = vmatprep.subr.mxu0 0.0
    %612 = vmatpush1.msra.mxu0 %v576
    %613 = vmatprep.subr.mxu0 0.0
    %614 = vmatpush1.msra.mxu0 %v577
    %615 = vmatprep.subr.mxu0 0.0
    %616 = vmatpush1.msra.mxu0 %v578
    %617 = vmatprep.subr.mxu0 0.0
    %618 = vmatpush1.msra.mxu0 %v579
    %619 = vmatprep.subr.mxu0 0.0
    %620 = vmatpush1.msra.mxu0 0.0
    %621 = vmatprep.subr.mxu0 0.0
    %622 = vmatpush1.msra.mxu0 0.0
    %623 = vmatprep.subr.mxu0 0.0
    %624 = vmatpush1.msra.mxu0 0.0
    %625 = vmatprep.subr.mxu0 0.0
    %626 = vmatpush1.msra.mxu0 0.0
    %627 = vmatprep.subr.mxu0 0.0
    %628 = vmatpush1.msra.mxu0 0.0
    %629 = vmatprep.subr.mxu0 0.0
    %630 = vmatpush1.msra.mxu0 0.0
    %631 = vmatprep.subr.mxu0 0.0
    %632 = vmatpush1.msra.mxu0 0.0
    %633 = vmatprep.subr.mxu0 0.0
    %634 = vmatpush1.msra.mxu0 0.0
    %635 = vmatprep.subr.mxu0 0.0
    %636 = vmatpush1.msra.mxu0 0.0
    %637 = vmatprep.subr.mxu0 0.0
    %638 = vmatpush1.msra.mxu0 0.0
    %639 = vmatprep.subr.mxu0 0.0
    %640 = vmatpush1.msra.mxu0 0.0
    %641 = vmatprep.subr.mxu0 0.0
    %642 = vmatpush1.msra.mxu0 0.0
    %643 = vmatprep.subr.mxu0 0.0
    %644 = vmatpush1.msra.mxu0 0.0
    %645 = vmatprep.subr.mxu0 0.0
    %646 = vmatpush1.msra.mxu0 0.0
    %647 = vmatprep.subr.mxu0 0.0
    %648 = vmatpush1.msra.mxu0 0.0
    %649 = vmatprep.subr.mxu0 0.0
    %650 = vmatpush1.msra.mxu0 0.0
    %651 = vmatprep.mubr.f32.mxu0 0.0
    %652 = vmatmul.mubr.f32.gmra.mrb[0].mxu0 %v562
    %v653 = vpop.f32.mrb[0].mxu0
    %v654 = vadd.f32 %v585, %v653
    %v655 = vpop.f32.mrb[0].mxu0
    %656 = vmatprep.mubr.f32.mxu0 0.0
    %657 = vmatmul.mubr.f32.gmra.mrb[0].mxu0 %v563
    %v658 = vpop.f32.mrb[0].mxu0
    %v659 = vadd.f32 %v585, %v658
    %v660 = vpop.f32.mrb[0].mxu0
    %661 = vdwg.mxu0
    %v662 = vadd.f32 %v396, %v654
    %v663 = vadd.f32 %v401, %v659
    %v664 = vmax.f32 %v662, 0.0
    %v665 = vmax.f32 %v663, 0.0
    %666 = vmatprep.subr.mxu0 0.0
    %667 = vmatpush1.msra.mxu0 %v664
    %668 = vmatprep.subr.mxu0 0.0
    %669 = vmatpush1.msra.mxu0 %v665
    %670 = vmatprep.subr.mxu0 0.0
    %671 = vmatpush1.msra.mxu0 0.0
    %672 = vmatprep.subr.mxu0 0.0
    %673 = vmatpush1.msra.mxu0 0.0
    %674 = vmatprep.subr.mxu0 0.0
    %675 = vmatpush1.msra.mxu0 0.0
    %676 = vmatprep.subr.mxu0 0.0
    %677 = vmatpush1.msra.mxu0 0.0
    %678 = vmatprep.subr.mxu0 0.0
    %679 = vmatpush1.msra.mxu0 0.0
    %680 = vmatprep.subr.mxu0 0.0
    %681 = vmatpush1.msra.mxu0 0.0
    %682 = vmatprep.subr.mxu0 0.0
    %683 = vmatpush1.msra.mxu0 0.0
    %684 = vmatprep.subr.mxu0 0.0
    %685 = vmatpush1.msra.mxu0 0.0
    %686 = vmatprep.subr.mxu0 0.0
    %687 = vmatpush1.msra.mxu0 0.0
    %688 = vmatprep.subr.mxu0 0.0
    %689 = vmatpush1.msra.mxu0 0.0
    %690 = vmatprep.subr.mxu0 0.0
    %691 = vmatpush1.msra.mxu0 0.0
    %692 = vmatprep.subr.mxu0 0.0
    %693 = vmatpush1.msra.mxu0 0.0
    %694 = vmatprep.subr.mxu0 0.0
    %695 = vmatpush1.msra.mxu0 0.0
    %696 = vmatprep.subr.mxu0 0.0
    %697 = vmatpush1.msra.mxu0 0.0
    %698 = vmatprep.subr.mxu0 0.0
    %699 = vmatpush1.msra.mxu0 0.0
    %700 = vmatprep.subr.mxu0 0.0
    %701 = vmatpush1.msra.mxu0 0.0
    %702 = vmatprep.subr.mxu0 0.0
    %703 = vmatpush1.msra.mxu0 0.0
    %704 = vmatprep.subr.mxu0 0.0
    %705 = vmatpush1.msra.mxu0 0.0
    %706 = vmatprep.subr.mxu0 0.0
    %707 = vmatpush1.msra.mxu0 0.0
    %708 = vmatprep.subr.mxu0 0.0
    %709 = vmatpush1.msra.mxu0 0.0
    %710 = vmatprep.subr.mxu0 0.0
    %711 = vmatpush1.msra.mxu0 0.0
    %712 = vmatprep.subr.mxu0 0.0
    %713 = vmatpush1.msra.mxu0 0.0
    %714 = vmatprep.subr.mxu0 0.0
    %715 = vmatpush1.msra.mxu0 0.0
    %716 = vmatprep.subr.mxu0 0.0
    %717 = vmatpush1.msra.mxu0 0.0
    %718 = vmatprep.subr.mxu0 0.0
    %719 = vmatpush1.msra.mxu0 0.0
    %720 = vmatprep.subr.mxu0 0.0
    %721 = vmatpush1.msra.mxu0 0.0
    %722 = vmatprep.subr.mxu0 0.0
    %723 = vmatpush1.msra.mxu0 0.0
    %724 = vmatprep.subr.mxu0 0.0
    %725 = vmatpush1.msra.mxu0 0.0
    %726 = vmatprep.subr.mxu0 0.0
    %727 = vmatpush1.msra.mxu0 0.0
    %728 = vmatprep.subr.mxu0 0.0
    %729 = vmatpush1.msra.mxu0 0.0
    %730 = vmatprep.mubr.f32.mxu0 0.0
    %731 = vmatmul.mubr.f32.gmra.mrb[0].mxu0 %v408
    %v732 = vpop.f32.mrb[0].mxu0
    %v733 = vadd.f32 0.0, %v732
    %v734 = vpop.f32.mrb[0].mxu0
    %735 = vdwg.mxu0
    %736 = vmatprep.subr.mxu0 0.0
    %737 = vmatpush1.msra.mxu0 %v733
    %738 = vmatprep.subr.mxu0 0.0
    %739 = vmatpush1.msra.mxu0 0.0
    %740 = vmatprep.subr.mxu0 0.0
    %741 = vmatpush1.msra.mxu0 0.0
    %742 = vmatprep.subr.mxu0 0.0
    %743 = vmatpush1.msra.mxu0 0.0
    %744 = vmatprep.subr.mxu0 0.0
    %745 = vmatpush1.msra.mxu0 0.0
    %746 = vmatprep.subr.mxu0 0.0
    %747 = vmatpush1.msra.mxu0 0.0
    %748 = vmatprep.subr.mxu0 0.0
    %749 = vmatpush1.msra.mxu0 0.0
    %750 = vmatprep.subr.mxu0 0.0
    %751 = vmatpush1.msra.mxu0 0.0
    %752 = vmatprep.subr.mxu0 0.0
    %753 = vmatpush1.msra.mxu0 0.0
    %754 = vmatprep.subr.mxu0 0.0
    %755 = vmatpush1.msra.mxu0 0.0
    %756 = vmatprep.subr.mxu0 0.0
    %757 = vmatpush1.msra.mxu0 0.0
    %758 = vmatprep.subr.mxu0 0.0
    %759 = vmatpush1.msra.mxu0 0.0
    %760 = vmatprep.subr.mxu0 0.0
    %761 = vmatpush1.msra.mxu0 0.0
    %762 = vmatprep.subr.mxu0 0.0
    %763 = vmatpush1.msra.mxu0 0.0
    %764 = vmatprep.subr.mxu0 0.0
    %765 = vmatpush1.msra.mxu0 0.0
    %766 = vmatprep.subr.mxu0 0.0
    %767 = vmatpush1.msra.mxu0 0.0
    %768 = vmatprep.subr.mxu0 0.0
    %769 = vmatpush1.msra.mxu0 0.0
    %770 = vmatprep.subr.mxu0 0.0
    %771 = vmatpush1.msra.mxu0 0.0
    %772 = vmatprep.subr.mxu0 0.0
    %773 = vmatpush1.msra.mxu0 0.0
    %774 = vmatprep.subr.mxu0 0.0
    %775 = vmatpush1.msra.mxu0 0.0
    %776 = vmatprep.subr.mxu0 0.0
    %777 = vmatpush1.msra.mxu0 0.0
    %778 = vmatprep.subr.mxu0 0.0
    %779 = vmatpush1.msra.mxu0 0.0
    %780 = vmatprep.subr.mxu0 0.0
    %781 = vmatpush1.msra.mxu0 0.0
    %782 = vmatprep.subr.mxu0 0.0
    %783 = vmatpush1.msra.mxu0 0.0
    %784 = vmatprep.subr.mxu0 0.0
    %785 = vmatpush1.msra.mxu0 0.0
    %786 = vmatprep.subr.mxu0 0.0
    %787 = vmatpush1.msra.mxu0 0.0
    %788 = vmatprep.subr.mxu0 0.0
    %789 = vmatpush1.msra.mxu0 0.0
    %790 = vmatprep.subr.mxu0 0.0
    %791 = vmatpush1.msra.mxu0 0.0
    %792 = vmatprep.subr.mxu0 0.0
    %793 = vmatpush1.msra.mxu0 0.0
    %794 = vmatprep.subr.mxu0 0.0
    %795 = vmatpush1.msra.mxu0 0.0
    %796 = vmatprep.subr.mxu0 0.0
    %797 = vmatpush1.msra.mxu0 0.0
    %798 = vmatprep.subr.mxu0 0.0
    %799 = vmatpush1.msra.mxu0 0.0
    %800 = vmatprep.mubr.f32.mxu0 0.0
    %801 = vmatmul.mubr.f32.gmra.mrb[0].mxu0 %v482
    %v802 = vpop.f32.mrb[0].mxu0
    %v803 = vadd.f32 0.0, %v802
    %v804 = vpop.f32.mrb[0].mxu0
    %805 = vmatprep.mubr.f32.mxu0 0.0
    %806 = vmatmul.mubr.f32.gmra.mrb[0].mxu0 %v485
    %v807 = vpop.f32.mrb[0].mxu0
    %v808 = vadd.f32 0.0, %v807
    %v809 = vpop.f32.mrb[0].mxu0
    %810 = vdwg.mxu0
    %v811 = vsub.f32 %v803, %v665
    %v812 = vsub.f32 %v808, %v664
    %813 = vmatprep.subr.mxu0 0.0
    %814 = vmatpush1.msra.mxu0 %v564
    %815 = vmatprep.subr.mxu0 0.0
    %816 = vmatpush1.msra.mxu0 %v565
    %817 = vmatprep.subr.mxu0 0.0
    %818 = vmatpush1.msra.mxu0 %v566
    %819 = vmatprep.subr.mxu0 0.0
    %820 = vmatpush1.msra.mxu0 %v567
    %821 = vmatprep.subr.mxu0 0.0
    %822 = vmatpush1.msra.mxu0 %v568
    %823 = vmatprep.subr.mxu0 0.0
    %824 = vmatpush1.msra.mxu0 %v569
    %825 = vmatprep.subr.mxu0 0.0
    %826 = vmatpush1.msra.mxu0 %v570
    %827 = vmatprep.subr.mxu0 0.0
    %828 = vmatpush1.msra.mxu0 %v571
    %829 = vmatprep.subr.mxu0 0.0
    %830 = vmatpush1.msra.mxu0 %v572
    %831 = vmatprep.subr.mxu0 0.0
    %832 = vmatpush1.msra.mxu0 %v573
    %833 = vmatprep.subr.mxu0 0.0
    %834 = vmatpush1.msra.mxu0 %v574
    %835 = vmatprep.subr.mxu0 0.0
    %836 = vmatpush1.msra.mxu0 %v575
    %837 = vmatprep.subr.mxu0 0.0
    %838 = vmatpush1.msra.mxu0 %v576
    %839 = vmatprep.subr.mxu0 0.0
    %840 = vmatpush1.msra.mxu0 %v577
    %841 = vmatprep.subr.mxu0 0.0
    %842 = vmatpush1.msra.mxu0 %v578
    %843 = vmatprep.subr.mxu0 0.0
    %844 = vmatpush1.msra.mxu0 %v579
    %845 = vmatprep.subr.mxu0 0.0
    %846 = vmatpush1.msra.mxu0 0.0
    %847 = vmatprep.subr.mxu0 0.0
    %848 = vmatpush1.msra.mxu0 0.0
    %849 = vmatprep.subr.mxu0 0.0
    %850 = vmatpush1.msra.mxu0 0.0
    %851 = vmatprep.subr.mxu0 0.0
    %852 = vmatpush1.msra.mxu0 0.0
    %853 = vmatprep.subr.mxu0 0.0
    %854 = vmatpush1.msra.mxu0 0.0
    %855 = vmatprep.subr.mxu0 0.0
    %856 = vmatpush1.msra.mxu0 0.0
    %857 = vmatprep.subr.mxu0 0.0
    %858 = vmatpush1.msra.mxu0 0.0
    %859 = vmatprep.subr.mxu0 0.0
    %860 = vmatpush1.msra.mxu0 0.0
    %861 = vmatprep.subr.mxu0 0.0
    %862 = vmatpush1.msra.mxu0 0.0
    %863 = vmatprep.subr.mxu0 0.0
    %864 = vmatpush1.msra.mxu0 0.0
    %865 = vmatprep.subr.mxu0 0.0
    %866 = vmatpush1.msra.mxu0 0.0
    %867 = vmatprep.subr.mxu0 0.0
    %868 = vmatpush1.msra.mxu0 0.0
    %869 = vmatprep.subr.mxu0 0.0
    %870 = vmatpush1.msra.mxu0 0.0
    %871 = vmatprep.subr.mxu0 0.0
    %872 = vmatpush1.msra.mxu0 0.0
    %873 = vmatprep.subr.mxu0 0.0
    %874 = vmatpush1.msra.mxu0 0.0
    %875 = vmatprep.subr.mxu0 0.0
    %876 = vmatpush1.msra.mxu0 0.0
    %877 = vmatprep.mubr.f32.mxu0 0.0
    %878 = vmatmul.mubr.f32.gmra.mrb[0].mxu0 %v811
    %v879 = vpop.f32.mrb[0].mxu0
    %v880 = vadd.f32 %v585, %v879
    %v881 = vpop.f32.mrb[0].mxu0
    %882 = vmatprep.mubr.f32.mxu0 0.0
    %883 = vmatmul.mubr.f32.gmra.mrb[0].mxu0 %v812
    %v884 = vpop.f32.mrb[0].mxu0
    %v885 = vadd.f32 %v585, %v884
    %v886 = vpop.f32.mrb[0].mxu0
    %887 = vdwg.mxu0
    %v888 = vadd.f32 %v396, %v880
    %v889 = vadd.f32 %v401, %v885
    %v890 = vmax.f32 %v888, 0.0
    %v891 = vmax.f32 %v889, 0.0
    %892 = vmatprep.subr.mxu0 0.0
    %893 = vmatpush1.msra.mxu0 %v890
    %894 = vmatprep.subr.mxu0 0.0
    %895 = vmatpush1.msra.mxu0 %v891
    %896 = vmatprep.subr.mxu0 0.0
    %897 = vmatpush1.msra.mxu0 0.0
    %898 = vmatprep.subr.mxu0 0.0
    %899 = vmatpush1.msra.mxu0 0.0
    %900 = vmatprep.subr.mxu0 0.0
    %901 = vmatpush1.msra.mxu0 0.0
    %902 = vmatprep.subr.mxu0 0.0
    %903 = vmatpush1.msra.mxu0 0.0
    %904 = vmatprep.subr.mxu0 0.0
    %905 = vmatpush1.msra.mxu0 0.0
    %906 = vmatprep.subr.mxu0 0.0
    %907 = vmatpush1.msra.mxu0 0.0
    %908 = vmatprep.subr.mxu0 0.0
    %909 = vmatpush1.msra.mxu0 0.0
    %910 = vmatprep.subr.mxu0 0.0
    %911 = vmatpush1.msra.mxu0 0.0
    %912 = vmatprep.subr.mxu0 0.0
    %913 = vmatpush1.msra.mxu0 0.0
    %914 = vmatprep.subr.mxu0 0.0
    %915 = vmatpush1.msra.mxu0 0.0
    %916 = vmatprep.subr.mxu0 0.0
    %917 = vmatpush1.msra.mxu0 0.0
    %918 = vmatprep.subr.mxu0 0.0
    %919 = vmatpush1.msra.mxu0 0.0
    %920 = vmatprep.subr.mxu0 0.0
    %921 = vmatpush1.msra.mxu0 0.0
    %922 = vmatprep.subr.mxu0 0.0
    %923 = vmatpush1.msra.mxu0 0.0
    %924 = vmatprep.subr.mxu0 0.0
    %925 = vmatpush1.msra.mxu0 0.0
    %926 = vmatprep.subr.mxu0 0.0
    %927 = vmatpush1.msra.mxu0 0.0
    %928 = vmatprep.subr.mxu0 0.0
    %929 = vmatpush1.msra.mxu0 0.0
    %930 = vmatprep.subr.mxu0 0.0
    %931 = vmatpush1.msra.mxu0 0.0
    %932 = vmatprep.subr.mxu0 0.0
    %933 = vmatpush1.msra.mxu0 0.0
    %934 = vmatprep.subr.mxu0 0.0
    %935 = vmatpush1.msra.mxu0 0.0
    %936 = vmatprep.subr.mxu0 0.0
    %937 = vmatpush1.msra.mxu0 0.0
    %938 = vmatprep.subr.mxu0 0.0
    %939 = vmatpush1.msra.mxu0 0.0
    %940 = vmatprep.subr.mxu0 0.0
    %941 = vmatpush1.msra.mxu0 0.0
    %942 = vmatprep.subr.mxu0 0.0
    %943 = vmatpush1.msra.mxu0 0.0
    %944 = vmatprep.subr.mxu0 0.0
    %945 = vmatpush1.msra.mxu0 0.0
    %946 = vmatprep.subr.mxu0 0.0
    %947 = vmatpush1.msra.mxu0 0.0
    %948 = vmatprep.subr.mxu0 0.0
    %949 = vmatpush1.msra.mxu0 0.0
    %950 = vmatprep.subr.mxu0 0.0
    %951 = vmatpush1.msra.mxu0 0.0
    %952 = vmatprep.subr.mxu0 0.0
    %953 = vmatpush1.msra.mxu0 0.0
    %954 = vmatprep.subr.mxu0 0.0
    %955 = vmatpush1.msra.mxu0 0.0
    %956 = vmatprep.mubr.f32.mxu0 0.0
    %957 = vmatmul.mubr.f32.gmra.mrb[0].mxu0 %v408
    %v958 = vpop.f32.mrb[0].mxu0
    %v959 = vadd.f32 0.0, %v958
    %v960 = vpop.f32.mrb[0].mxu0
    %961 = vdwg.mxu0
    %962 = vmatprep.subr.mxu0 0.0
    %963 = vmatpush1.msra.mxu0 %v959
    %964 = vmatprep.subr.mxu0 0.0
    %965 = vmatpush1.msra.mxu0 0.0
    %966 = vmatprep.subr.mxu0 0.0
    %967 = vmatpush1.msra.mxu0 0.0
    %968 = vmatprep.subr.mxu0 0.0
    %969 = vmatpush1.msra.mxu0 0.0
    %970 = vmatprep.subr.mxu0 0.0
    %971 = vmatpush1.msra.mxu0 0.0
    %972 = vmatprep.subr.mxu0 0.0
    %973 = vmatpush1.msra.mxu0 0.0
    %974 = vmatprep.subr.mxu0 0.0
    %975 = vmatpush1.msra.mxu0 0.0
    %976 = vmatprep.subr.mxu0 0.0
    %977 = vmatpush1.msra.mxu0 0.0
    %978 = vmatprep.subr.mxu0 0.0
    %979 = vmatpush1.msra.mxu0 0.0
    %980 = vmatprep.subr.mxu0 0.0
    %981 = vmatpush1.msra.mxu0 0.0
    %982 = vmatprep.subr.mxu0 0.0
    %983 = vmatpush1.msra.mxu0 0.0
    %984 = vmatprep.subr.mxu0 0.0
    %985 = vmatpush1.msra.mxu0 0.0
    %986 = vmatprep.subr.mxu0 0.0
    %987 = vmatpush1.msra.mxu0 0.0
    %988 = vmatprep.subr.mxu0 0.0
    %989 = vmatpush1.msra.mxu0 0.0
    %990 = vmatprep.subr.mxu0 0.0
    %991 = vmatpush1.msra.mxu0 0.0
    %992 = vmatprep.subr.mxu0 0.0
    %993 = vmatpush1.msra.mxu0 0.0
    %994 = vmatprep.subr.mxu0 0.0
    %995 = vmatpush1.msra.mxu0 0.0
    %996 = vmatprep.subr.mxu0 0.0
    %997 = vmatpush1.msra.mxu0 0.0
    %998 = vmatprep.subr.mxu0 0.0
    %999 = vmatpush1.msra.mxu0 0.0
    %1000 = vmatprep.subr.mxu0 0.0
    %1001 = vmatpush1.msra.mxu0 0.0
    %1002 = vmatprep.subr.mxu0 0.0
    %1003 = vmatpush1.msra.mxu0 0.0
    %1004 = vmatprep.subr.mxu0 0.0
    %1005 = vmatpush1.msra.mxu0 0.0
    %1006 = vmatprep.subr.mxu0 0.0
    %1007 = vmatpush1.msra.mxu0 0.0
    %1008 = vmatprep.subr.mxu0 0.0
    %1009 = vmatpush1.msra.mxu0 0.0
    %1010 = vmatprep.subr.mxu0 0.0
    %1011 = vmatpush1.msra.mxu0 0.0
    %1012 = vmatprep.subr.mxu0 0.0
    %1013 = vmatpush1.msra.mxu0 0.0
    %1014 = vmatprep.subr.mxu0 0.0
    %1015 = vmatpush1.msra.mxu0 0.0
    %1016 = vmatprep.subr.mxu0 0.0
    %1017 = vmatpush1.msra.mxu0 0.0
    %1018 = vmatprep.subr.mxu0 0.0
    %1019 = vmatpush1.msra.mxu0 0.0
    %1020 = vmatprep.subr.mxu0 0.0
    %1021 = vmatpush1.msra.mxu0 0.0
    %1022 = vmatprep.subr.mxu0 0.0
    %1023 = vmatpush1.msra.mxu0 0.0
    %1024 = vmatprep.subr.mxu0 0.0
    %1025 = vmatpush1.msra.mxu0 0.0
    %1026 = vmatprep.mubr.f32.mxu0 0.0
    %1027 = vmatmul.mubr.f32.gmra.mrb[0].mxu0 %v482
    %v1028 = vpop.f32.mrb[0].mxu0
    %v1029 = vadd.f32 0.0, %v1028
    %v1030 = vpop.f32.mrb[0].mxu0
    %1031 = vmatprep.mubr.f32.mxu0 0.0
    %1032 = vmatmul.mubr.f32.gmra.mrb[0].mxu0 %v485
    %v1033 = vpop.f32.mrb[0].mxu0
    %v1034 = vadd.f32 0.0, %v1033
    %v1035 = vpop.f32.mrb[0].mxu0
    %1036 = vdwg.mxu0
    %v1037 = vsub.f32 %v1029, %v891
    %v1038 = vsub.f32 %v1034, %v890
    %1039 = vmatprep.subr.mxu0 0.0
    %1040 = vmatpush1.msra.mxu0 %v564
    %1041 = vmatprep.subr.mxu0 0.0
    %1042 = vmatpush1.msra.mxu0 %v565
    %1043 = vmatprep.subr.mxu0 0.0
    %1044 = vmatpush1.msra.mxu0 %v566
    %1045 = vmatprep.subr.mxu0 0.0
    %1046 = vmatpush1.msra.mxu0 %v567
    %1047 = vmatprep.subr.mxu0 0.0
    %1048 = vmatpush1.msra.mxu0 %v568
    %1049 = vmatprep.subr.mxu0 0.0
    %1050 = vmatpush1.msra.mxu0 %v569
    %1051 = vmatprep.subr.mxu0 0.0
    %1052 = vmatpush1.msra.mxu0 %v570
    %1053 = vmatprep.subr.mxu0 0.0
    %1054 = vmatpush1.msra.mxu0 %v571
    %1055 = vmatprep.subr.mxu0 0.0
    %1056 = vmatpush1.msra.mxu0 %v572
    %1057 = vmatprep.subr.mxu0 0.0
    %1058 = vmatpush1.msra.mxu0 %v573
    %1059 = vmatprep.subr.mxu0 0.0
    %1060 = vmatpush1.msra.mxu0 %v574
    %1061 = vmatprep.subr.mxu0 0.0
    %1062 = vmatpush1.msra.mxu0 %v575
    %1063 = vmatprep.subr.mxu0 0.0
    %1064 = vmatpush1.msra.mxu0 %v576
    %1065 = vmatprep.subr.mxu0 0.0
    %1066 = vmatpush1.msra.mxu0 %v577
    %1067 = vmatprep.subr.mxu0 0.0
    %1068 = vmatpush1.msra.mxu0 %v578
    %1069 = vmatprep.subr.mxu0 0.0
    %1070 = vmatpush1.msra.mxu0 %v579
    %1071 = vmatprep.subr.mxu0 0.0
    %1072 = vmatpush1.msra.mxu0 0.0
    %1073 = vmatprep.subr.mxu0 0.0
    %1074 = vmatpush1.msra.mxu0 0.0
    %1075 = vmatprep.subr.mxu0 0.0
    %1076 = vmatpush1.msra.mxu0 0.0
    %1077 = vmatprep.subr.mxu0 0.0
    %1078 = vmatpush1.msra.mxu0 0.0
    %1079 = vmatprep.subr.mxu0 0.0
    %1080 = vmatpush1.msra.mxu0 0.0
    %1081 = vmatprep.subr.mxu0 0.0
    %1082 = vmatpush1.msra.mxu0 0.0
    %1083 = vmatprep.subr.mxu0 0.0
    %1084 = vmatpush1.msra.mxu0 0.0
    %1085 = vmatprep.subr.mxu0 0.0
    %1086 = vmatpush1.msra.mxu0 0.0
    %1087 = vmatprep.subr.mxu0 0.0
    %1088 = vmatpush1.msra.mxu0 0.0
    %1089 = vmatprep.subr.mxu0 0.0
    %1090 = vmatpush1.msra.mxu0 0.0
    %1091 = vmatprep.subr.mxu0 0.0
    %1092 = vmatpush1.msra.mxu0 0.0
    %1093 = vmatprep.subr.mxu0 0.0
    %1094 = vmatpush1.msra.mxu0 0.0
    %1095 = vmatprep.subr.mxu0 0.0
    %1096 = vmatpush1.msra.mxu0 0.0
    %1097 = vmatprep.subr.mxu0 0.0
    %1098 = vmatpush1.msra.mxu0 0.0
    %1099 = vmatprep.subr.mxu0 0.0
    %1100 = vmatpush1.msra.mxu0 0.0
    %1101 = vmatprep.subr.mxu0 0.0
    %1102 = vmatpush1.msra.mxu0 0.0
    %1103 = vmatprep.mubr.f32.mxu0 0.0
    %1104 = vmatmul.mubr.f32.gmra.mrb[0].mxu0 %v1037
    %v1105 = vpop.f32.mrb[0].mxu0
    %v1106 = vadd.f32 %v585, %v1105
    %v1107 = vpop.f32.mrb[0].mxu0
    %1108 = vmatprep.mubr.f32.mxu0 0.0
    %1109 = vmatmul.mubr.f32.gmra.mrb[0].mxu0 %v1038
    %v1110 = vpop.f32.mrb[0].mxu0
    %v1111 = vadd.f32 %v585, %v1110
    %v1112 = vpop.f32.mrb[0].mxu0
    %1113 = vdwg.mxu0
    %v1114 = vadd.f32 %v396, %v1106
    %v1115 = vadd.f32 %v401, %v1111
    %v1116 = vmax.f32 %v1114, 0.0
    %v1117 = vmax.f32 %v1115, 0.0
    %1118 = vmatprep.subr.mxu0 0.0
    %1119 = vmatpush1.msra.mxu0 %v1116
    %1120 = vmatprep.subr.mxu0 0.0
    %1121 = vmatpush1.msra.mxu0 %v1117
    %1122 = vmatprep.subr.mxu0 0.0
    %1123 = vmatpush1.msra.mxu0 0.0
    %1124 = vmatprep.subr.mxu0 0.0
    %1125 = vmatpush1.msra.mxu0 0.0
    %1126 = vmatprep.subr.mxu0 0.0
    %1127 = vmatpush1.msra.mxu0 0.0
    %1128 = vmatprep.subr.mxu0 0.0
    %1129 = vmatpush1.msra.mxu0 0.0
    %1130 = vmatprep.subr.mxu0 0.0
    %1131 = vmatpush1.msra.mxu0 0.0
    %1132 = vmatprep.subr.mxu0 0.0
    %1133 = vmatpush1.msra.mxu0 0.0
    %1134 = vmatprep.subr.mxu0 0.0
    %1135 = vmatpush1.msra.mxu0 0.0
    %1136 = vmatprep.subr.mxu0 0.0
    %1137 = vmatpush1.msra.mxu0 0.0
    %1138 = vmatprep.subr.mxu0 0.0
    %1139 = vmatpush1.msra.mxu0 0.0
    %1140 = vmatprep.subr.mxu0 0.0
    %1141 = vmatpush1.msra.mxu0 0.0
    %1142 = vmatprep.subr.mxu0 0.0
    %1143 = vmatpush1.msra.mxu0 0.0
    %1144 = vmatprep.subr.mxu0 0.0
    %1145 = vmatpush1.msra.mxu0 0.0
    %1146 = vmatprep.subr.mxu0 0.0
    %1147 = vmatpush1.msra.mxu0 0.0
    %1148 = vmatprep.subr.mxu0 0.0
    %1149 = vmatpush1.msra.mxu0 0.0
    %1150 = vmatprep.subr.mxu0 0.0
    %1151 = vmatpush1.msra.mxu0 0.0
    %1152 = vmatprep.subr.mxu0 0.0
    %1153 = vmatpush1.msra.mxu0 0.0
    %1154 = vmatprep.subr.mxu0 0.0
    %1155 = vmatpush1.msra.mxu0 0.0
    %1156 = vmatprep.subr.mxu0 0.0
    %1157 = vmatpush1.msra.mxu0 0.0
    %1158 = vmatprep.subr.mxu0 0.0
    %1159 = vmatpush1.msra.mxu0 0.0
    %1160 = vmatprep.subr.mxu0 0.0
    %1161 = vmatpush1.msra.mxu0 0.0
    %1162 = vmatprep.subr.mxu0 0.0
    %1163 = vmatpush1.msra.mxu0 0.0
    %1164 = vmatprep.subr.mxu0 0.0
    %1165 = vmatpush1.msra.mxu0 0.0
    %1166 = vmatprep.subr.mxu0 0.0
    %1167 = vmatpush1.msra.mxu0 0.0
    %1168 = vmatprep.subr.mxu0 0.0
    %1169 = vmatpush1.msra.mxu0 0.0
    %1170 = vmatprep.subr.mxu0 0.0
    %1171 = vmatpush1.msra.mxu0 0.0
    %1172 = vmatprep.subr.mxu0 0.0
    %1173 = vmatpush1.msra.mxu0 0.0
    %1174 = vmatprep.subr.mxu0 0.0
    %1175 = vmatpush1.msra.mxu0 0.0
    %1176 = vmatprep.subr.mxu0 0.0
    %1177 = vmatpush1.msra.mxu0 0.0
    %1178 = vmatprep.subr.mxu0 0.0
    %1179 = vmatpush1.msra.mxu0 0.0
    %1180 = vmatprep.subr.mxu0 0.0
    %1181 = vmatpush1.msra.mxu0 0.0
    %1182 = vmatprep.mubr.f32.mxu0 0.0
    %1183 = vmatmul.mubr.f32.gmra.mrb[0].mxu0 %v408
    %v1184 = vpop.f32.mrb[0].mxu0
    %v1185 = vadd.f32 0.0, %v1184
    %v1186 = vpop.f32.mrb[0].mxu0
    %1187 = vdwg.mxu0
    %v1188 = vld [vmem:[#allocation8] sm:$0xff]
    %v1189 = vld [vmem:[#allocation20] sm:$0xff]
    %v1190 = vld [vmem:[#allocation20 + $0x8] sm:$0xff]
    %v1191 = vld [vmem:[#allocation20 + $0x10] sm:$0xff]
    %v1192 = vld [vmem:[#allocation20 + $0x18] sm:$0xff]
    %v1193 = vld [vmem:[#allocation20 + $0x20] sm:$0xff]
    %v1194 = vld [vmem:[#allocation20 + $0x28] sm:$0xff]
    %v1195 = vld [vmem:[#allocation20 + $0x30] sm:$0xff]
    %v1196 = vld [vmem:[#allocation20 + $0x38] sm:$0xff]
    %v1197 = vld [vmem:[#allocation20 + $0x40] sm:$0xff]
    %v1198 = vld [vmem:[#allocation20 + $0x48] sm:$0xff]
    %v1199 = vld [vmem:[#allocation20 + $0x50] sm:$0xff]
    %v1200 = vld [vmem:[#allocation20 + $0x58] sm:$0xff]
    %v1201 = vld [vmem:[#allocation20 + $0x60] sm:$0xff]
    %v1202 = vld [vmem:[#allocation20 + $0x68] sm:$0xff]
    %v1203 = vld [vmem:[#allocation20 + $0x70] sm:$0xff]
    %v1204 = vld [vmem:[#allocation20 + $0x78] sm:$0xff]
    %v1205 = vld [vmem:[#allocation22] sm:$0x1]
    %v1207 = vlaneseq
    %v1208 = vshrl.u32 %v1207, 7
    %v1209 = vsub.s32 0, %v1208
    %v1210 = vrot.slane %v1205, %v1209
    %1212 = vmatprep.subr.mxu0 0.0
    %1213 = vmatpush1.msra.mxu0 %v1189
    %1214 = vmatprep.subr.mxu0 0.0
    %1215 = vmatpush1.msra.mxu0 %v1190
    %1216 = vmatprep.subr.mxu0 0.0
    %1217 = vmatpush1.msra.mxu0 %v1191
    %1218 = vmatprep.subr.mxu0 0.0
    %1219 = vmatpush1.msra.mxu0 %v1192
    %1220 = vmatprep.subr.mxu0 0.0
    %1221 = vmatpush1.msra.mxu0 %v1193
    %1222 = vmatprep.subr.mxu0 0.0
    %1223 = vmatpush1.msra.mxu0 %v1194
    %1224 = vmatprep.subr.mxu0 0.0
    %1225 = vmatpush1.msra.mxu0 %v1195
    %1226 = vmatprep.subr.mxu0 0.0
    %1227 = vmatpush1.msra.mxu0 %v1196
    %1228 = vmatprep.subr.mxu0 0.0
    %1229 = vmatpush1.msra.mxu0 %v1197
    %1230 = vmatprep.subr.mxu0 0.0
    %1231 = vmatpush1.msra.mxu0 %v1198
    %1232 = vmatprep.subr.mxu0 0.0
    %1233 = vmatpush1.msra.mxu0 %v1199
    %1234 = vmatprep.subr.mxu0 0.0
    %1235 = vmatpush1.msra.mxu0 %v1200
    %1236 = vmatprep.subr.mxu0 0.0
    %1237 = vmatpush1.msra.mxu0 %v1201
    %1238 = vmatprep.subr.mxu0 0.0
    %1239 = vmatpush1.msra.mxu0 %v1202
    %1240 = vmatprep.subr.mxu0 0.0
    %1241 = vmatpush1.msra.mxu0 %v1203
    %1242 = vmatprep.subr.mxu0 0.0
    %1243 = vmatpush1.msra.mxu0 %v1204
    %1244 = vmatprep.subr.mxu0 0.0
    %1245 = vmatpush1.msra.mxu0 0.0
    %1246 = vmatprep.subr.mxu0 0.0
    %1247 = vmatpush1.msra.mxu0 0.0
    %1248 = vmatprep.subr.mxu0 0.0
    %1249 = vmatpush1.msra.mxu0 0.0
    %1250 = vmatprep.subr.mxu0 0.0
    %1251 = vmatpush1.msra.mxu0 0.0
    %1252 = vmatprep.subr.mxu0 0.0
    %1253 = vmatpush1.msra.mxu0 0.0
    %1254 = vmatprep.subr.mxu0 0.0
    %1255 = vmatpush1.msra.mxu0 0.0
    %1256 = vmatprep.subr.mxu0 0.0
    %1257 = vmatpush1.msra.mxu0 0.0
    %1258 = vmatprep.subr.mxu0 0.0
    %1259 = vmatpush1.msra.mxu0 0.0
    %1260 = vmatprep.subr.mxu0 0.0
    %1261 = vmatpush1.msra.mxu0 0.0
    %1262 = vmatprep.subr.mxu0 0.0
    %1263 = vmatpush1.msra.mxu0 0.0
    %1264 = vmatprep.subr.mxu0 0.0
    %1265 = vmatpush1.msra.mxu0 0.0
    %1266 = vmatprep.subr.mxu0 0.0
    %1267 = vmatpush1.msra.mxu0 0.0
    %1268 = vmatprep.subr.mxu0 0.0
    %1269 = vmatpush1.msra.mxu0 0.0
    %1270 = vmatprep.subr.mxu0 0.0
    %1271 = vmatpush1.msra.mxu0 0.0
    %1272 = vmatprep.subr.mxu0 0.0
    %1273 = vmatpush1.msra.mxu0 0.0
    %1274 = vmatprep.subr.mxu0 0.0
    %1275 = vmatpush1.msra.mxu0 0.0
    %1276 = vmatprep.mubr.f32.mxu0 0.0
    %1277 = vmatmul.mubr.f32.gmra.mrb[0].mxu0 %v1188
    %v1278 = vpop.f32.mrb[0].mxu0
    %v1279 = vadd.f32 %v1210, %v1278
    %v1280 = vpop.f32.mrb[0].mxu0
    %1281 = vdwg.mxu0
    %v1282 = vadd.f32 %v1279, %v1185
    %v1283 = vld [vmem:[#allocation23] sm:$0xff]
    %v1284 = vld [vmem:[#allocation23 + $0x8] sm:$0xff]
    %v1285 = vld [vmem:[#allocation23 + $0x10] sm:$0xff]
    %v1286 = vld [vmem:[#allocation23 + $0x18] sm:$0xff]
    %v1287 = vld [vmem:[#allocation23 + $0x20] sm:$0xff]
    %v1288 = vld [vmem:[#allocation23 + $0x28] sm:$0xff]
    %v1289 = vld [vmem:[#allocation23 + $0x30] sm:$0xff]
    %v1290 = vld [vmem:[#allocation23 + $0x38] sm:$0xff]
    %v1291 = vld [vmem:[#allocation23 + $0x40] sm:$0xff]
    %v1292 = vld [vmem:[#allocation23 + $0x48] sm:$0xff]
    %v1293 = vld [vmem:[#allocation23 + $0x50] sm:$0xff]
    %v1294 = vld [vmem:[#allocation23 + $0x58] sm:$0xff]
    %v1295 = vld [vmem:[#allocation23 + $0x60] sm:$0xff]
    %v1296 = vld [vmem:[#allocation23 + $0x68] sm:$0xff]
    %v1297 = vld [vmem:[#allocation23 + $0x70] sm:$0xff]
    %v1298 = vld [vmem:[#allocation23 + $0x78] sm:$0xff]
    %v1299 = vld [vmem:[#allocation25] sm:$0x1]
    %v1301 = vlaneseq
    %v1302 = vshrl.u32 %v1301, 7
    %v1303 = vsub.s32 0, %v1302
    %v1304 = vrot.slane %v1299, %v1303
    %1306 = vmatprep.subr.mxu0 0.0
    %1307 = vmatpush1.msra.mxu0 %v1283
    %1308 = vmatprep.subr.mxu0 0.0
    %1309 = vmatpush1.msra.mxu0 %v1284
    %1310 = vmatprep.subr.mxu0 0.0
    %1311 = vmatpush1.msra.mxu0 %v1285
    %1312 = vmatprep.subr.mxu0 0.0
    %1313 = vmatpush1.msra.mxu0 %v1286
    %1314 = vmatprep.subr.mxu0 0.0
    %1315 = vmatpush1.msra.mxu0 %v1287
    %1316 = vmatprep.subr.mxu0 0.0
    %1317 = vmatpush1.msra.mxu0 %v1288
    %1318 = vmatprep.subr.mxu0 0.0
    %1319 = vmatpush1.msra.mxu0 %v1289
    %1320 = vmatprep.subr.mxu0 0.0
    %1321 = vmatpush1.msra.mxu0 %v1290
    %1322 = vmatprep.subr.mxu0 0.0
    %1323 = vmatpush1.msra.mxu0 %v1291
    %1324 = vmatprep.subr.mxu0 0.0
    %1325 = vmatpush1.msra.mxu0 %v1292
    %1326 = vmatprep.subr.mxu0 0.0
    %1327 = vmatpush1.msra.mxu0 %v1293
    %1328 = vmatprep.subr.mxu0 0.0
    %1329 = vmatpush1.msra.mxu0 %v1294
    %1330 = vmatprep.subr.mxu0 0.0
    %1331 = vmatpush1.msra.mxu0 %v1295
    %1332 = vmatprep.subr.mxu0 0.0
    %1333 = vmatpush1.msra.mxu0 %v1296
    %1334 = vmatprep.subr.mxu0 0.0
    %1335 = vmatpush1.msra.mxu0 %v1297
    %1336 = vmatprep.subr.mxu0 0.0
    %1337 = vmatpush1.msra.mxu0 %v1298
    %1338 = vmatprep.subr.mxu0 0.0
    %1339 = vmatpush1.msra.mxu0 0.0
    %1340 = vmatprep.subr.mxu0 0.0
    %1341 = vmatpush1.msra.mxu0 0.0
    %1342 = vmatprep.subr.mxu0 0.0
    %1343 = vmatpush1.msra.mxu0 0.0
    %1344 = vmatprep.subr.mxu0 0.0
    %1345 = vmatpush1.msra.mxu0 0.0
    %1346 = vmatprep.subr.mxu0 0.0
    %1347 = vmatpush1.msra.mxu0 0.0
    %1348 = vmatprep.subr.mxu0 0.0
    %1349 = vmatpush1.msra.mxu0 0.0
    %1350 = vmatprep.subr.mxu0 0.0
    %1351 = vmatpush1.msra.mxu0 0.0
    %1352 = vmatprep.subr.mxu0 0.0
    %1353 = vmatpush1.msra.mxu0 0.0
    %1354 = vmatprep.subr.mxu0 0.0
    %1355 = vmatpush1.msra.mxu0 0.0
    %1356 = vmatprep.subr.mxu0 0.0
    %1357 = vmatpush1.msra.mxu0 0.0
    %1358 = vmatprep.subr.mxu0 0.0
    %1359 = vmatpush1.msra.mxu0 0.0
    %1360 = vmatprep.subr.mxu0 0.0
    %1361 = vmatpush1.msra.mxu0 0.0
    %1362 = vmatprep.subr.mxu0 0.0
    %1363 = vmatpush1.msra.mxu0 0.0
    %1364 = vmatprep.subr.mxu0 0.0
    %1365 = vmatpush1.msra.mxu0 0.0
    %1366 = vmatprep.subr.mxu0 0.0
    %1367 = vmatpush1.msra.mxu0 0.0
    %1368 = vmatprep.subr.mxu0 0.0
    %1369 = vmatpush1.msra.mxu0 0.0
    %1370 = vmatprep.mubr.f32.mxu0 0.0
    %1371 = vmatmul.mubr.f32.gmra.mrb[0].mxu0 %v1282
    %v1372 = vpop.f32.mrb[0].mxu0
    %v1373 = vadd.f32 %v1304, %v1372
    %v1374 = vpop.f32.mrb[0].mxu0
    %1375 = vdwg.mxu0
    %v1376 = vmax.f32 %v1373, 0.0
    %v1377 = vld [vmem:[#allocation26] sm:$0xff]
    %v1378 = vld [vmem:[#allocation26 + $0x8] sm:$0xff]
    %v1379 = vld [vmem:[#allocation26 + $0x10] sm:$0xff]
    %v1380 = vld [vmem:[#allocation26 + $0x18] sm:$0xff]
    %v1381 = vld [vmem:[#allocation26 + $0x20] sm:$0xff]
    %v1382 = vld [vmem:[#allocation26 + $0x28] sm:$0xff]
    %v1383 = vld [vmem:[#allocation26 + $0x30] sm:$0xff]
    %v1384 = vld [vmem:[#allocation26 + $0x38] sm:$0xff]
    %v1385 = vld [vmem:[#allocation26 + $0x40] sm:$0xff]
    %v1386 = vld [vmem:[#allocation26 + $0x48] sm:$0xff]
    %v1387 = vld [vmem:[#allocation26 + $0x50] sm:$0xff]
    %v1388 = vld [vmem:[#allocation26 + $0x58] sm:$0xff]
    %v1389 = vld [vmem:[#allocation26 + $0x60] sm:$0xff]
    %v1390 = vld [vmem:[#allocation26 + $0x68] sm:$0xff]
    %v1391 = vld [vmem:[#allocation26 + $0x70] sm:$0xff]
    %v1392 = vld [vmem:[#allocation26 + $0x78] sm:$0xff]
    %v1393 = vld [vmem:[#allocation28] sm:$0x1]
    %v1395 = vlaneseq
    %v1396 = vshrl.u32 %v1395, 7
    %v1397 = vsub.s32 0, %v1396
    %v1398 = vrot.slane %v1393, %v1397
    %1400 = vmatprep.subr.mxu0 0.0
    %1401 = vmatpush1.msra.mxu0 %v1377
    %1402 = vmatprep.subr.mxu0 0.0
    %1403 = vmatpush1.msra.mxu0 %v1378
    %1404 = vmatprep.subr.mxu0 0.0
    %1405 = vmatpush1.msra.mxu0 %v1379
    %1406 = vmatprep.subr.mxu0 0.0
    %1407 = vmatpush1.msra.mxu0 %v1380
    %1408 = vmatprep.subr.mxu0 0.0
    %1409 = vmatpush1.msra.mxu0 %v1381
    %1410 = vmatprep.subr.mxu0 0.0
    %1411 = vmatpush1.msra.mxu0 %v1382
    %1412 = vmatprep.subr.mxu0 0.0
    %1413 = vmatpush1.msra.mxu0 %v1383
    %1414 = vmatprep.subr.mxu0 0.0
    %1415 = vmatpush1.msra.mxu0 %v1384
    %1416 = vmatprep.subr.mxu0 0.0
    %1417 = vmatpush1.msra.mxu0 %v1385
    %1418 = vmatprep.subr.mxu0 0.0
    %1419 = vmatpush1.msra.mxu0 %v1386
    %1420 = vmatprep.subr.mxu0 0.0
    %1421 = vmatpush1.msra.mxu0 %v1387
    %1422 = vmatprep.subr.mxu0 0.0
    %1423 = vmatpush1.msra.mxu0 %v1388
    %1424 = vmatprep.subr.mxu0 0.0
    %1425 = vmatpush1.msra.mxu0 %v1389
    %1426 = vmatprep.subr.mxu0 0.0
    %1427 = vmatpush1.msra.mxu0 %v1390
    %1428 = vmatprep.subr.mxu0 0.0
    %1429 = vmatpush1.msra.mxu0 %v1391
    %1430 = vmatprep.subr.mxu0 0.0
    %1431 = vmatpush1.msra.mxu0 %v1392
    %1432 = vmatprep.subr.mxu0 0.0
    %1433 = vmatpush1.msra.mxu0 0.0
    %1434 = vmatprep.subr.mxu0 0.0
    %1435 = vmatpush1.msra.mxu0 0.0
    %1436 = vmatprep.subr.mxu0 0.0
    %1437 = vmatpush1.msra.mxu0 0.0
    %1438 = vmatprep.subr.mxu0 0.0
    %1439 = vmatpush1.msra.mxu0 0.0
    %1440 = vmatprep.subr.mxu0 0.0
    %1441 = vmatpush1.msra.mxu0 0.0
    %1442 = vmatprep.subr.mxu0 0.0
    %1443 = vmatpush1.msra.mxu0 0.0
    %1444 = vmatprep.subr.mxu0 0.0
    %1445 = vmatpush1.msra.mxu0 0.0
    %1446 = vmatprep.subr.mxu0 0.0
    %1447 = vmatpush1.msra.mxu0 0.0
    %1448 = vmatprep.subr.mxu0 0.0
    %1449 = vmatpush1.msra.mxu0 0.0
    %1450 = vmatprep.subr.mxu0 0.0
    %1451 = vmatpush1.msra.mxu0 0.0
    %1452 = vmatprep.subr.mxu0 0.0
    %1453 = vmatpush1.msra.mxu0 0.0
    %1454 = vmatprep.subr.mxu0 0.0
    %1455 = vmatpush1.msra.mxu0 0.0
    %1456 = vmatprep.subr.mxu0 0.0
    %1457 = vmatpush1.msra.mxu0 0.0
    %1458 = vmatprep.subr.mxu0 0.0
    %1459 = vmatpush1.msra.mxu0 0.0
    %1460 = vmatprep.subr.mxu0 0.0
    %1461 = vmatpush1.msra.mxu0 0.0
    %1462 = vmatprep.subr.mxu0 0.0
    %1463 = vmatpush1.msra.mxu0 0.0
    %1464 = vmatprep.mubr.f32.mxu0 0.0
    %1465 = vmatmul.mubr.f32.gmra.mrb[0].mxu0 %v1376
    %v1466 = vpop.f32.mrb[0].mxu0
    %v1467 = vadd.f32 %v1398, %v1466
    %v1468 = vpop.f32.mrb[0].mxu0
    %1469 = vdwg.mxu0
    %1470 = vmatprep.subr.mxu0 0.0
    %1471 = vmatpush1.xpose.msra.mxu0 %v1376
    %1472 = vmatprep.subr.mxu0 0.0
    %1473 = vmatpush1.xpose.msra.mxu0 0.0
    %1474 = vmatprep.subr.mxu0 0.0
    %1475 = vmatpush1.xpose.msra.mxu0 0.0
    %1476 = vmatprep.subr.mxu0 0.0
    %1477 = vmatpush1.xpose.msra.mxu0 0.0
    %1478 = vmatprep.subr.mxu0 0.0
    %1479 = vmatpush1.xpose.msra.mxu0 0.0
    %1480 = vmatprep.subr.mxu0 0.0
    %1481 = vmatpush1.xpose.msra.mxu0 0.0
    %1482 = vmatprep.subr.mxu0 0.0
    %1483 = vmatpush1.xpose.msra.mxu0 0.0
    %1484 = vmatprep.subr.mxu0 0.0
    %1485 = vmatpush1.xpose.msra.mxu0 0.0
    %1486 = vmatprep.subr.mxu0 0.0
    %1487 = vmatpush1.xpose.msra.mxu0 0.0
    %1488 = vmatprep.subr.mxu0 0.0
    %1489 = vmatpush1.xpose.msra.mxu0 0.0
    %1490 = vmatprep.subr.mxu0 0.0
    %1491 = vmatpush1.xpose.msra.mxu0 0.0
    %1492 = vmatprep.subr.mxu0 0.0
    %1493 = vmatpush1.xpose.msra.mxu0 0.0
    %1494 = vmatprep.subr.mxu0 0.0
    %1495 = vmatpush1.xpose.msra.mxu0 0.0
    %1496 = vmatprep.subr.mxu0 0.0
    %1497 = vmatpush1.xpose.msra.mxu0 0.0
    %1498 = vmatprep.subr.mxu0 0.0
    %1499 = vmatpush1.xpose.msra.mxu0 0.0
    %1500 = vmatprep.subr.mxu0 0.0
    %1501 = vmatpush1.xpose.msra.mxu0 0.0
    %1502 = vmatprep.subr.mxu0 0.0
    %1503 = vmatpush1.xpose.msra.mxu0 0.0
    %1504 = vmatprep.subr.mxu0 0.0
    %1505 = vmatpush1.xpose.msra.mxu0 0.0
    %1506 = vmatprep.subr.mxu0 0.0
    %1507 = vmatpush1.xpose.msra.mxu0 0.0
    %1508 = vmatprep.subr.mxu0 0.0
    %1509 = vmatpush1.xpose.msra.mxu0 0.0
    %1510 = vmatprep.subr.mxu0 0.0
    %1511 = vmatpush1.xpose.msra.mxu0 0.0
    %1512 = vmatprep.subr.mxu0 0.0
    %1513 = vmatpush1.xpose.msra.mxu0 0.0
    %1514 = vmatprep.subr.mxu0 0.0
    %1515 = vmatpush1.xpose.msra.mxu0 0.0
    %1516 = vmatprep.subr.mxu0 0.0
    %1517 = vmatpush1.xpose.msra.mxu0 0.0
    %1518 = vmatprep.subr.mxu0 0.0
    %1519 = vmatpush1.xpose.msra.mxu0 0.0
    %1520 = vmatprep.subr.mxu0 0.0
    %1521 = vmatpush1.xpose.msra.mxu0 0.0
    %1522 = vmatprep.subr.mxu0 0.0
    %1523 = vmatpush1.xpose.msra.mxu0 0.0
    %1524 = vmatprep.subr.mxu0 0.0
    %1525 = vmatpush1.xpose.msra.mxu0 0.0
    %1526 = vmatprep.subr.mxu0 0.0
    %1527 = vmatpush1.xpose.msra.mxu0 0.0
    %1528 = vmatprep.subr.mxu0 0.0
    %1529 = vmatpush1.xpose.msra.mxu0 0.0
    %1530 = vmatprep.subr.mxu0 0.0
    %1531 = vmatpush1.xpose.msra.mxu0 0.0
    %1532 = vmatprep.subr.mxu0 0.0
    %1533 = vmatpush1.xpose.msra.mxu0 0.0
    %1534 = vmatprep.mubr.f32.mxu0 0.0
    %1535 = vmatmul.mubr.f32.gmra.mrb[0].mxu0 %v1467
    %v1536 = vpop.f32.mrb[0].mxu0
    %v1537 = vadd.f32 0.0, %v1536
    %v1538 = vpop.f32.mrb[0].mxu0
    %1539 = vdwg.mxu0
    %v1540 = vld [vmem:[#allocation10] sm:$0xff]
    %v1541 = vld [vmem:[#allocation11] sm:$0x1]
    %1543 = vset.pattern.permute.xlu0 0
    %1544 = vperm.xlu0 %1543, %v1540
    %v1545 = vpop.permute.xlu0 %1544
    %v1548 = vlaneseq
    %v1549 = vshrl.u32 %v1548, 7
    %v1550 = vsub.s32 0, %v1549
    %v1551 = vrot.slane %v1541, %v1550
    %vm1553 = vcmp.eq.f32.partialorder %v1545, %v1551
    %vm1554 = vcmp.ge.f32.partialorder %v1540, 0.0
    %v1555 = vsel %vm1554, 1, 0
    %1556 = vset.pattern.permute.xlu0 0
    %1557 = vperm.xlu0 %1556, %v1555
    %v1558 = vpop.permute.xlu0 %1557
    %vm1559 = vcmp.eq.s32.totalorder %v1558, 1
    %vm1560 = vmand %vm1553, %vm1559
    %v1561 = vsel %vm1560, %v1537, -1e+09
    %v1562 = vsel %vm480, %v1561, -inf
    %1563 = vmax.xlane.f32.xlu0 %v1562
    %v1564 = vpop.xlane.xlu0 %1563
    %v1565 = vsub.f32 %v1561, %v1564
    %v1566 = vmul.f32 %v1565, 1.442695
    %v1567 = vpow.pop %v1566
    %v1568 = vsel %vm480, %v1567, 0.0
    %1569 = vadd.xlane.f32.xlu0 %v1568
    %v1570 = vpop.xlane.xlu0 %1569
    %v1571 = vrcp.pop %v1570
    %v1572 = vmul.f32 %v1567, %v1571
    %v1574 = vsel %vm480, %v1572, 0
    %1576 = vmatprep.subr.mxu0 0.0
    %1577 = vmatpush1.msra.mxu0 %v1376
    %1578 = vmatprep.subr.mxu0 0.0
    %1579 = vmatpush1.msra.mxu0 0.0
    %1580 = vmatprep.subr.mxu0 0.0
    %1581 = vmatpush1.msra.mxu0 0.0
    %1582 = vmatprep.subr.mxu0 0.0
    %1583 = vmatpush1.msra.mxu0 0.0
    %1584 = vmatprep.subr.mxu0 0.0
    %1585 = vmatpush1.msra.mxu0 0.0
    %1586 = vmatprep.subr.mxu0 0.0
    %1587 = vmatpush1.msra.mxu0 0.0
    %1588 = vmatprep.subr.mxu0 0.0
    %1589 = vmatpush1.msra.mxu0 0.0
    %1590 = vmatprep.subr.mxu0 0.0
    %1591 = vmatpush1.msra.mxu0 0.0
    %1592 = vmatprep.subr.mxu0 0.0
    %1593 = vmatpush1.msra.mxu0 0.0
    %1594 = vmatprep.subr.mxu0 0.0
    %1595 = vmatpush1.msra.mxu0 0.0
    %1596 = vmatprep.subr.mxu0 0.0
    %1597 = vmatpush1.msra.mxu0 0.0
    %1598 = vmatprep.subr.mxu0 0.0
    %1599 = vmatpush1.msra.mxu0 0.0
    %1600 = vmatprep.subr.mxu0 0.0
    %1601 = vmatpush1.msra.mxu0 0.0
    %1602 = vmatprep.subr.mxu0 0.0
    %1603 = vmatpush1.msra.mxu0 0.0
    %1604 = vmatprep.subr.mxu0 0.0
    %1605 = vmatpush1.msra.mxu0 0.0
    %1606 = vmatprep.subr.mxu0 0.0
    %1607 = vmatpush1.msra.mxu0 0.0
    %1608 = vmatprep.subr.mxu0 0.0
    %1609 = vmatpush1.msra.mxu0 0.0
    %1610 = vmatprep.subr.mxu0 0.0
    %1611 = vmatpush1.msra.mxu0 0.0
    %1612 = vmatprep.subr.mxu0 0.0
    %1613 = vmatpush1.msra.mxu0 0.0
    %1614 = vmatprep.subr.mxu0 0.0
    %1615 = vmatpush1.msra.mxu0 0.0
    %1616 = vmatprep.subr.mxu0 0.0
    %1617 = vmatpush1.msra.mxu0 0.0
    %1618 = vmatprep.subr.mxu0 0.0
    %1619 = vmatpush1.msra.mxu0 0.0
    %1620 = vmatprep.subr.mxu0 0.0
    %1621 = vmatpush1.msra.mxu0 0.0
    %1622 = vmatprep.subr.mxu0 0.0
    %1623 = vmatpush1.msra.mxu0 0.0
    %1624 = vmatprep.subr.mxu0 0.0
    %1625 = vmatpush1.msra.mxu0 0.0
    %1626 = vmatprep.subr.mxu0 0.0
    %1627 = vmatpush1.msra.mxu0 0.0
    %1628 = vmatprep.subr.mxu0 0.0
    %1629 = vmatpush1.msra.mxu0 0.0
    %1630 = vmatprep.subr.mxu0 0.0
    %1631 = vmatpush1.msra.mxu0 0.0
    %1632 = vmatprep.subr.mxu0 0.0
    %1633 = vmatpush1.msra.mxu0 0.0
    %1634 = vmatprep.subr.mxu0 0.0
    %1635 = vmatpush1.msra.mxu0 0.0
    %1636 = vmatprep.subr.mxu0 0.0
    %1637 = vmatpush1.msra.mxu0 0.0
    %1638 = vmatprep.subr.mxu0 0.0
    %1639 = vmatpush1.msra.mxu0 0.0
    %1640 = vmatprep.mubr.f32.mxu0 0.0
    %1641 = vmatmul.mubr.f32.gmra.mrb[0].mxu0 %v1574
    %v1642 = vpop.f32.mrb[0].mxu0
    %v1643 = vadd.f32 0.0, %v1642
    %v1644 = vpop.f32.mrb[0].mxu0
    %1645 = vdwg.mxu0
    %v1646 = vld [vmem:[#allocation29] sm:$0xff]
    %v1647 = vld [vmem:[#allocation29 + $0x8] sm:$0xff]
    %v1648 = vld [vmem:[#allocation29 + $0x10] sm:$0xff]
    %v1649 = vld [vmem:[#allocation29 + $0x18] sm:$0xff]
    %v1650 = vld [vmem:[#allocation29 + $0x20] sm:$0xff]
    %v1651 = vld [vmem:[#allocation29 + $0x28] sm:$0xff]
    %v1652 = vld [vmem:[#allocation29 + $0x30] sm:$0xff]
    %v1653 = vld [vmem:[#allocation29 + $0x38] sm:$0xff]
    %v1654 = vld [vmem:[#allocation29 + $0x40] sm:$0xff]
    %v1655 = vld [vmem:[#allocation29 + $0x48] sm:$0xff]
    %v1656 = vld [vmem:[#allocation29 + $0x50] sm:$0xff]
    %v1657 = vld [vmem:[#allocation29 + $0x58] sm:$0xff]
    %v1658 = vld [vmem:[#allocation29 + $0x60] sm:$0xff]
    %v1659 = vld [vmem:[#allocation29 + $0x68] sm:$0xff]
    %v1660 = vld [vmem:[#allocation29 + $0x70] sm:$0xff]
    %v1661 = vld [vmem:[#allocation29 + $0x78] sm:$0xff]
    %v1662 = vld [vmem:[#allocation31] sm:$0x1]
    %v1664 = vlaneseq
    %v1665 = vshrl.u32 %v1664, 7
    %v1666 = vsub.s32 0, %v1665
    %v1667 = vrot.slane %v1662, %v1666
    %1669 = vmatprep.subr.mxu0 0.0
    %1670 = vmatpush1.msra.mxu0 %v1646
    %1671 = vmatprep.subr.mxu0 0.0
    %1672 = vmatpush1.msra.mxu0 %v1647
    %1673 = vmatprep.subr.mxu0 0.0
    %1674 = vmatpush1.msra.mxu0 %v1648
    %1675 = vmatprep.subr.mxu0 0.0
    %1676 = vmatpush1.msra.mxu0 %v1649
    %1677 = vmatprep.subr.mxu0 0.0
    %1678 = vmatpush1.msra.mxu0 %v1650
    %1679 = vmatprep.subr.mxu0 0.0
    %1680 = vmatpush1.msra.mxu0 %v1651
    %1681 = vmatprep.subr.mxu0 0.0
    %1682 = vmatpush1.msra.mxu0 %v1652
    %1683 = vmatprep.subr.mxu0 0.0
    %1684 = vmatpush1.msra.mxu0 %v1653
    %1685 = vmatprep.subr.mxu0 0.0
    %1686 = vmatpush1.msra.mxu0 %v1654
    %1687 = vmatprep.subr.mxu0 0.0
    %1688 = vmatpush1.msra.mxu0 %v1655
    %1689 = vmatprep.subr.mxu0 0.0
    %1690 = vmatpush1.msra.mxu0 %v1656
    %1691 = vmatprep.subr.mxu0 0.0
    %1692 = vmatpush1.msra.mxu0 %v1657
    %1693 = vmatprep.subr.mxu0 0.0
    %1694 = vmatpush1.msra.mxu0 %v1658
    %1695 = vmatprep.subr.mxu0 0.0
    %1696 = vmatpush1.msra.mxu0 %v1659
    %1697 = vmatprep.subr.mxu0 0.0
    %1698 = vmatpush1.msra.mxu0 %v1660
    %1699 = vmatprep.subr.mxu0 0.0
    %1700 = vmatpush1.msra.mxu0 %v1661
    %1701 = vmatprep.subr.mxu0 0.0
    %1702 = vmatpush1.msra.mxu0 0.0
    %1703 = vmatprep.subr.mxu0 0.0
    %1704 = vmatpush1.msra.mxu0 0.0
    %1705 = vmatprep.subr.mxu0 0.0
    %1706 = vmatpush1.msra.mxu0 0.0
    %1707 = vmatprep.subr.mxu0 0.0
    %1708 = vmatpush1.msra.mxu0 0.0
    %1709 = vmatprep.subr.mxu0 0.0
    %1710 = vmatpush1.msra.mxu0 0.0
    %1711 = vmatprep.subr.mxu0 0.0
    %1712 = vmatpush1.msra.mxu0 0.0
    %1713 = vmatprep.subr.mxu0 0.0
    %1714 = vmatpush1.msra.mxu0 0.0
    %1715 = vmatprep.subr.mxu0 0.0
    %1716 = vmatpush1.msra.mxu0 0.0
    %1717 = vmatprep.subr.mxu0 0.0
    %1718 = vmatpush1.msra.mxu0 0.0
    %1719 = vmatprep.subr.mxu0 0.0
    %1720 = vmatpush1.msra.mxu0 0.0
    %1721 = vmatprep.subr.mxu0 0.0
    %1722 = vmatpush1.msra.mxu0 0.0
    %1723 = vmatprep.subr.mxu0 0.0
    %1724 = vmatpush1.msra.mxu0 0.0
    %1725 = vmatprep.subr.mxu0 0.0
    %1726 = vmatpush1.msra.mxu0 0.0
    %1727 = vmatprep.subr.mxu0 0.0
    %1728 = vmatpush1.msra.mxu0 0.0
    %1729 = vmatprep.subr.mxu0 0.0
    %1730 = vmatpush1.msra.mxu0 0.0
    %1731 = vmatprep.subr.mxu0 0.0
    %1732 = vmatpush1.msra.mxu0 0.0
    %1733 = vmatprep.mubr.f32.mxu0 0.0
    %1734 = vmatmul.mubr.f32.gmra.mrb[0].mxu0 %v1643
    %v1735 = vpop.f32.mrb[0].mxu0
    %v1736 = vadd.f32 %v1667, %v1735
    %v1737 = vpop.f32.mrb[0].mxu0
    %1738 = vdwg.mxu0
    %v1739 = vmax.f32 %v1736, 0.0
    %v1740 = vld [vmem:[#allocation13] sm:$0x3]
    %v1741 = vadd.f32 %v1376, %v1739
    %v1743 = vsel %vm480, %v1740, 0
    %1745 = vmatprep.subr.mxu0 0.0
    %1746 = vmatpush1.msra.mxu0 %v1741
    %1747 = vmatprep.subr.mxu0 0.0
    %1748 = vmatpush1.msra.mxu0 0.0
    %1749 = vmatprep.subr.mxu0 0.0
    %1750 = vmatpush1.msra.mxu0 0.0
    %1751 = vmatprep.subr.mxu0 0.0
    %1752 = vmatpush1.msra.mxu0 0.0
    %1753 = vmatprep.subr.mxu0 0.0
    %1754 = vmatpush1.msra.mxu0 0.0
    %1755 = vmatprep.subr.mxu0 0.0
    %1756 = vmatpush1.msra.mxu0 0.0
    %1757 = vmatprep.subr.mxu0 0.0
    %1758 = vmatpush1.msra.mxu0 0.0
    %1759 = vmatprep.subr.mxu0 0.0
    %1760 = vmatpush1.msra.mxu0 0.0
    %1761 = vmatprep.subr.mxu0 0.0
    %1762 = vmatpush1.msra.mxu0 0.0
    %1763 = vmatprep.subr.mxu0 0.0
    %1764 = vmatpush1.msra.mxu0 0.0
    %1765 = vmatprep.subr.mxu0 0.0
    %1766 = vmatpush1.msra.mxu0 0.0
    %1767 = vmatprep.subr.mxu0 0.0
    %1768 = vmatpush1.msra.mxu0 0.0
    %1769 = vmatprep.subr.mxu0 0.0
    %1770 = vmatpush1.msra.mxu0 0.0
    %1771 = vmatprep.subr.mxu0 0.0
    %1772 = vmatpush1.msra.mxu0 0.0
    %1773 = vmatprep.subr.mxu0 0.0
    %1774 = vmatpush1.msra.mxu0 0.0
    %1775 = vmatprep.subr.mxu0 0.0
    %1776 = vmatpush1.msra.mxu0 0.0
    %1777 = vmatprep.subr.mxu0 0.0
    %1778 = vmatpush1.msra.mxu0 0.0
    %1779 = vmatprep.subr.mxu0 0.0
    %1780 = vmatpush1.msra.mxu0 0.0
    %1781 = vmatprep.subr.mxu0 0.0
    %1782 = vmatpush1.msra.mxu0 0.0
    %1783 = vmatprep.subr.mxu0 0.0
    %1784 = vmatpush1.msra.mxu0 0.0
    %1785 = vmatprep.subr.mxu0 0.0
    %1786 = vmatpush1.msra.mxu0 0.0
    %1787 = vmatprep.subr.mxu0 0.0
    %1788 = vmatpush1.msra.mxu0 0.0
    %1789 = vmatprep.subr.mxu0 0.0
    %1790 = vmatpush1.msra.mxu0 0.0
    %1791 = vmatprep.subr.mxu0 0.0
    %1792 = vmatpush1.msra.mxu0 0.0
    %1793 = vmatprep.subr.mxu0 0.0
    %1794 = vmatpush1.msra.mxu0 0.0
    %1795 = vmatprep.subr.mxu0 0.0
    %1796 = vmatpush1.msra.mxu0 0.0
    %1797 = vmatprep.subr.mxu0 0.0
    %1798 = vmatpush1.msra.mxu0 0.0
    %1799 = vmatprep.subr.mxu0 0.0
    %1800 = vmatpush1.msra.mxu0 0.0
    %1801 = vmatprep.subr.mxu0 0.0
    %1802 = vmatpush1.msra.mxu0 0.0
    %1803 = vmatprep.subr.mxu0 0.0
    %1804 = vmatpush1.msra.mxu0 0.0
    %1805 = vmatprep.subr.mxu0 0.0
    %1806 = vmatpush1.msra.mxu0 0.0
    %1807 = vmatprep.subr.mxu0 0.0
    %1808 = vmatpush1.msra.mxu0 0.0
    %1809 = vmatprep.mubr.f32.mxu0 0.0
    %1810 = vmatmul.mubr.f32.gmra.mrb[0].mxu0 %v1743
    %v1811 = vpop.f32.mrb[0].mxu0
    %v1812 = vadd.f32 0.0, %v1811
    %v1813 = vpop.f32.mrb[0].mxu0
    %1814 = vdwg.mxu0
    %1815 = vst [vmem:[#allocation32] sm:$0x3] %v1812
    // Predicated region
    $region154: #{tpu_custom_call.1} parent=1 // pred_check
      _
    $region155: #{tpu_custom_call.1} parent=1 // pred_check_branch
      %1817 = sbr.rel (0) target = $region157
    $region156: #{tpu_custom_call.1} parent=1 // pred_region
      %s1819 = ssub.s32 32, 32
      %1820 = vsyncadd [#allocation4], %s1819
      %s1822 = sshll.u32 [#allocation32], 4
      %s1823 = int_to_ptr.vmem [resolvable:$true] %s1822
      %1825 = dma.vmem_to_hbm [thread:$0]  %s1823, 32, %s19, [#allocation4]
    $region157: #{tpu_custom_call.1} parent=1 // pred_fallthru
      _
    // Predicated region
    $region158: #{tpu_custom_call.1} parent=1 // pred_check
      _
    $region159: #{tpu_custom_call.1} parent=1 // pred_check_branch
      %1827 = sbr.rel (0) target = $region161
    $region160: #{tpu_custom_call.1} parent=1 // pred_region
      %1828 = dma.done [#allocation4], 32
    $region161: #{tpu_custom_call.1} parent=1 // pred_fallthru
      _
    %1829 = vsyncpa [#allocation3], 1
    %1830 = vsyncpa [#allocation6], 1
    %1831 = vsyncpa [#allocation9], 1
    %1832 = vsyncpa [#allocation12], 1
    %1833 = vsyncpa [#allocation15], 1
    %1834 = vsyncpa [#allocation18], 1
    %1835 = vsyncpa [#allocation21], 1
    %1836 = vsyncpa [#allocation24], 1
    %1837 = vsyncpa [#allocation27], 1
    %1838 = vsyncpa [#allocation30], 1
    %1839 = vsyncpa [#allocation4], 1

</llo_original>
